<compile_context>
chip_gen: v5e
topology: v5e:2x2
jax: 0.10.0
libtpu: 0.0.40
codegen_flags: <defaults>
</compile_context>

<pallas_src>
import math
from functools import partial

import numpy as np
import jax
import jax.numpy as jnp
from jax.experimental import pallas as pl
from jax.experimental.pallas import tpu as pltpu

WINDOW_SIZE = 11
SIGMA = 1.5
C1 = 0.01 ** 2
C2 = 0.03 ** 2


def _gaussian_1d_np(window_size: int, sigma: float) -> np.ndarray:
    # Identical math to gaussian() in the torch reference (center = ws/2, float div).
    g = np.array(
        [math.exp(-((x - window_size / 2) ** 2) / (2.0 * sigma ** 2))
         for x in range(window_size)],
        dtype=np.float32,
    )
    return (g / g.sum()).astype(np.float32)   # 2D window = outer(g, g) -> separable


def _round_up(x: int, m: int) -> int:
    return ((x + m - 1) // m) * m


def _pick_lane_pack(n_planes: int, Wp: int) -> int:
    """# of planes laid side-by-side along the lane axis (target <=128 payload lanes)."""
    max_pack = max(1, 128 // Wp)
    best = 1
    for d in range(1, n_planes + 1):
        if n_planes % d == 0 and d <= max_pack:
            best = d
    return best


def _pick_row_block(g_rows: int, Hp: int, w_lanes: int,
                    budget_bytes: int = 2 * 1024 * 1024) -> int:
    """Plane-row-groups per grid step: largest block under the per-input VMEM
    budget that still leaves >=2 (ideally an even number of) grid steps so the
    'parallel' grid axis can use both v7x TensorCores."""
    per_group = Hp * w_lanes * 4
    divisors = [d for d in range(1, g_rows + 1) if g_rows % d == 0]
    fitting = [d for d in divisors if d * per_group <= budget_bytes] or [1]
    # TODO(synk): planes too large even at d=1 need spatial strip tiling with a
    # 2*pad halo; fall back to one row-group per step.
    even = [d for d in fitting if (g_rows // d) >= 2 and (g_rows // d) % 2 == 0]
    multi = [d for d in fitting if (g_rows // d) >= 2]
    if even:
        return max(even)
    if multi:
        return max(multi)
    return max(fitting)


def _make_ssim_kernel(window_size: int, rows_in: int, w_lanes: int):
    taps = [float(t) for t in _gaussian_1d_np(window_size, SIGMA)]
    ws = window_size
    rows_out = rows_in - (ws - 1)
    cols_out = w_lanes - (ws - 1)
    # The reference window (center ws/2 = 5.5) satisfies taps[k] == taps[ws-k].
    symmetric = all(taps[k] == taps[ws - k] for k in range(1, ws // 2 + 1))

    def filt(a, axis, out_len):
        """1D Gaussian pass (shift-and-accumulate along `axis`), folding the
        mirrored taps together: 6 muls instead of 11 for ws=11."""
        def sh(k):
            return a[k:k + out_len, :] if axis == 0 else a[:, k:k + out_len]
        # TODO(synk): shifts could use pltpu.roll (XLU) or a banded-Toeplitz MXU
        # matmul if bundle dumps show per-tap relayout copies.
        acc = taps[0] * sh(0)
        if symmetric:
            k = 1
            while k < ws - k:
                acc = acc + taps[k] * (sh(k) + sh(ws - k))
                k += 1
            if k == ws - k:                # middle tap (even window sizes)
                acc = acc + taps[k] * sh(k)
        else:
            for k in range(1, ws):
                acc = acc + taps[k] * sh(k)
        return acc

    def wpass(a):   # 11 taps along the lane axis
        return filt(a, 1, cols_out)

    def hpass(a):   # 11 taps along the sublane axis
        return filt(a, 0, rows_out)

    def kernel(p1_ref, p2_ref, rmask_ref, cmask_ref, o_ref):
        x = p1_ref[...]                    # (rows_in, w_lanes) f32, zero-padded planes
        y = p2_ref[...]

        # Products computed once per block (not per filter tap).
        xx = x * x
        yy = y * y
        xy = x * y

        mu1 = hpass(wpass(x))
        mu2 = hpass(wpass(y))
        e11 = hpass(wpass(xx))             # E[x*x]
        e22 = hpass(wpass(yy))             # E[y*y]
        e12 = hpass(wpass(xy))             # E[x*y]

        mu1_sq = mu1 * mu1
        mu2_sq = mu2 * mu2
        mu1_mu2 = mu1 * mu2
        sigma1_sq = e11 - mu1_sq
        sigma2_sq = e22 - mu2_sq
        sigma12 = e12 - mu1_mu2

        num = (2.0 * mu1_mu2 + C1) * (2.0 * sigma12 + C2)
        den = (mu1_sq + mu2_sq + C1) * (sigma1_sq + sigma2_sq + C2)
        # approx=True -> EUP vrcp on the otherwise-idle transcendental slot.
        ssim_map = num * pl.reciprocal(den, approx=True)

        # Row/column validity of packed planes (masks are real inputs, so no
        # captured-constant failure and no per-step hoisted broadcast).
        rmask = rmask_ref[...][0:rows_out, :]          # (rows_out, 1)
        cmask = cmask_ref[...][:, 0:cols_out]          # (1, cols_out)
        total = jnp.sum(ssim_map * rmask * cmask)      # one partial sum per step

        # Lane-dense (1,8,128) slot per grid step; wrapper reads [:, 0, 0].
        o_ref[...] = jnp.full((1, 8, 128), total, jnp.float32)

    return kernel


def _layout_planes(img, pad, Hp, Wp, g_rows, g_cols, w_lanes):
    """(B,C,H,W) -> (g_rows*Hp, w_lanes): zero-padded planes packed along
    sublanes (row groups, 8-aligned Hp) and lanes (column groups, 128-aligned)."""
    B, C, H, W = img.shape
    x = jnp.pad(img.astype(jnp.float32),
                ((0, 0), (0, 0), (pad, Hp - H - pad), (pad, pad)))
    x = x.reshape(g_rows, g_cols, Hp, Wp).transpose(0, 2, 1, 3)
    x = x.reshape(g_rows * Hp, g_cols * Wp)
    if w_lanes > g_cols * Wp:
        x = jnp.pad(x, ((0, 0), (0, w_lanes - g_cols * Wp)))
    return x


@partial(jax.jit, static_argnames=("window_size",))
def ssim_loss(img1, img2, window_size: int = WINDOW_SIZE):
    """SSIM (size_average=True) of two NCHW image batches. Returns a scalar f32."""
    # TODO(synk): size_average=False (per-image mean) path not implemented.
    B, C, H, W = img1.shape
    pad = window_size // 2
    Wp = W + 2 * pad
    Hp = _round_up(H + 2 * pad, 8)            # sublane-aligned padded plane height
    n_planes = B * C

    g_cols = _pick_lane_pack(n_planes, Wp)    # planes packed along lanes
    g_rows = n_planes // g_cols               # plane row-groups along sublanes
    w_lanes = _round_up(g_cols * Wp, 128)     # lane-aligned total width

    p_blk = _pick_row_block(g_rows, Hp, w_lanes)
    n_blocks = g_rows // p_blk
    rows_in = p_blk * Hp

    p1 = _layout_planes(img1, pad, Hp, Wp, g_rows, g_cols, w_lanes)
    p2 = _layout_planes(img2, pad, Hp, Wp, g_rows, g_cols, w_lanes)

    # Validity masks, passed as inputs (computed in the wrapper, tiny HBM cost).
    row_in_plane = jnp.arange(g_rows * Hp, dtype=jnp.int32) % Hp
    rmask = (row_in_plane < H).astype(jnp.float32).reshape(g_rows * Hp, 1)
    col = jnp.arange(w_lanes, dtype=jnp.int32)
    cmask = (((col % Wp) < W) & (col < g_cols * Wp)).astype(jnp.float32)
    cmask = cmask.reshape(1, w_lanes)

    kernel = _make_ssim_kernel(window_size, rows_in, w_lanes)

    partial_sums = pl.pallas_call(
        kernel,
        out_shape=jax.ShapeDtypeStruct((n_blocks, 8, 128), jnp.float32),
        grid_spec=pltpu.PrefetchScalarGridSpec(
            num_scalar_prefetch=0,
            grid=(n_blocks,),
            in_specs=[
                pl.BlockSpec((rows_in, w_lanes), lambda i: (i, 0)),
                pl.BlockSpec((rows_in, w_lanes), lambda i: (i, 0)),
                pl.BlockSpec((rows_in, 1), lambda i: (i, 0)),
                pl.BlockSpec((1, w_lanes), lambda i: (0, 0)),
            ],
            out_specs=pl.BlockSpec((1, 8, 128), lambda i: (i, 0, 0)),
        ),
        compiler_params=pltpu.CompilerParams(
            # Each grid step owns its own output slot -> safe to shard the
            # row-group axis across TensorCores on v7x; harmless on v5e/v6e.
            dimension_semantics=("parallel",),
            vmem_limit_bytes=48 * 1024 * 1024,
        ),
    )(p1, p2, rmask, cmask)

    return jnp.sum(partial_sums[:, 0, 0]) / jnp.float32(n_planes * H * W)


def _ssim_reference(img1, img2, window_size: int = WINDOW_SIZE):
    """Pure-JAX mirror of the PyTorch module (depthwise conv2d formulation)."""
    B, C, H, W = img1.shape
    g = jnp.asarray(_gaussian_1d_np(window_size, SIGMA))
    w2d = jnp.outer(g, g)
    kern = jnp.broadcast_to(w2d, (C, 1, window_size, window_size)).astype(jnp.float32)
    pad = window_size // 2

    def conv(x):
        return jax.lax.conv_general_dilated(
            x.astype(jnp.float32), kern, (1, 1),
            [(pad, pad), (pad, pad)],
            dimension_numbers=("NCHW", "OIHW", "NCHW"),
            feature_group_count=C,
            precision=jax.lax.Precision.HIGHEST)

    i1 = img1.astype(jnp.float32)
    i2 = img2.astype(jnp.float32)
    mu1, mu2 = conv(i1), conv(i2)
    mu1_sq, mu2_sq, mu1_mu2 = mu1 * mu1, mu2 * mu2, mu1 * mu2
    s1 = conv(i1 * i1) - mu1_sq
    s2 = conv(i2 * i2) - mu2_sq
    s12 = conv(i1 * i2) - mu1_mu2
    ssim_map = ((2 * mu1_mu2 + C1) * (2 * s12 + C2)) / (
        (mu1_sq + mu2_sq + C1) * (s1 + s2 + C2))
    return ssim_map.mean()


if __name__ == "__main__":
    key = jax.random.PRNGKey(0)
    k1, k2 = jax.random.split(key)
    # small NCHW inputs, matching the PyTorch module's expectation
    img1 = jax.random.uniform(k1, (2, 4, 16, 16), dtype=jnp.float32)
    img2 = jax.random.uniform(k2, (2, 4, 16, 16), dtype=jnp.float32)

    loss = ssim_loss(img1, img2)
    jax.block_until_ready(loss)

    ref = _ssim_reference(img1, img2)
    err = float(jnp.abs(loss - ref))
    if not (err < 5e-3):
        raise AssertionError(
            f"SSIM mismatch: kernel={float(loss)} ref={float(ref)} |err|={err}")
    print("KERNEL_OK")
</pallas_src>

<mosaic_0001>
module attributes {stable_mosaic.version = 11 : i64} {
  func.func @kernel(%arg0: i32, %arg1: memref<32x128xf32, #tpu.memory_space<vmem>>, %arg2: memref<32x128xf32, #tpu.memory_space<vmem>>, %arg3: memref<32x1xf32, #tpu.memory_space<vmem>>, %arg4: memref<1x128xf32, #tpu.memory_space<vmem>>, %arg5: memref<1x8x128xf32, #tpu.memory_space<vmem>>) attributes {dimension_semantics = [#tpu.dimension_semantics<parallel>], iteration_bounds = array<i64: 2>, scalar_prefetch = 0 : i64, scratch_operands = 0 : i64, tpu.core_type = #tpu.core_type<tc>, window_params = [{transform_indices = @transform_0, window_bounds = array<i64: 32, 128>}, {transform_indices = @transform_1, window_bounds = array<i64: 32, 128>}, {transform_indices = @transform_2, window_bounds = array<i64: 32, 1>}, {pipeline_mode = #tpu.pipeline_mode<synchronous>, transform_indices = @transform_3, window_bounds = array<i64: 1, 128>}, {transform_indices = @transform_4, window_bounds = array<i64: 1, 8, 128>}]} {
    %c0 = arith.constant 0 : index
    %c0_0 = arith.constant 0 : index
    %0 = vector.load %arg1[%c0, %c0_0] : memref<32x128xf32, #tpu.memory_space<vmem>>, vector<32x128xf32>
    %c0_1 = arith.constant 0 : index
    %c0_2 = arith.constant 0 : index
    %1 = vector.load %arg2[%c0_1, %c0_2] : memref<32x128xf32, #tpu.memory_space<vmem>>, vector<32x128xf32>
    %2 = arith.mulf %0, %0 : vector<32x128xf32>
    %3 = arith.mulf %1, %1 : vector<32x128xf32>
    %4 = arith.mulf %0, %1 : vector<32x128xf32>
    %5 = vector.extract_strided_slice %0 {offsets = [0, 0], sizes = [32, 118], strides = [1, 1]} : vector<32x128xf32> to vector<32x118xf32>
    %cst = arith.constant 3.20297899E-4 : f32
    %6 = vector.broadcast %cst : f32 to vector<32x118xf32>
    %7 = arith.mulf %6, %5 : vector<32x118xf32>
    %8 = vector.extract_strided_slice %0 {offsets = [0, 1], sizes = [32, 118], strides = [1, 1]} : vector<32x128xf32> to vector<32x118xf32>
    %9 = vector.extract_strided_slice %0 {offsets = [0, 10], sizes = [32, 118], strides = [1, 1]} : vector<32x128xf32> to vector<32x118xf32>
    %10 = arith.addf %8, %9 : vector<32x118xf32>
    %cst_3 = arith.constant 0.00295564951 : f32
    %11 = vector.broadcast %cst_3 : f32 to vector<32x118xf32>
    %12 = arith.mulf %11, %10 : vector<32x118xf32>
    %13 = arith.addf %7, %12 : vector<32x118xf32>
    %14 = vector.extract_strided_slice %0 {offsets = [0, 2], sizes = [32, 118], strides = [1, 1]} : vector<32x128xf32> to vector<32x118xf32>
    %15 = vector.extract_strided_slice %0 {offsets = [0, 9], sizes = [32, 118], strides = [1, 1]} : vector<32x128xf32> to vector<32x118xf32>
    %16 = arith.addf %14, %15 : vector<32x118xf32>
    %cst_4 = arith.constant 0.0174876731 : f32
    %17 = vector.broadcast %cst_4 : f32 to vector<32x118xf32>
    %18 = arith.mulf %17, %16 : vector<32x118xf32>
    %19 = arith.addf %13, %18 : vector<32x118xf32>
    %20 = vector.extract_strided_slice %0 {offsets = [0, 3], sizes = [32, 118], strides = [1, 1]} : vector<32x128xf32> to vector<32x118xf32>
    %21 = vector.extract_strided_slice %0 {offsets = [0, 8], sizes = [32, 118], strides = [1, 1]} : vector<32x128xf32> to vector<32x118xf32>
    %22 = arith.addf %20, %21 : vector<32x118xf32>
    %cst_5 = arith.constant 0.0663424209 : f32
    %23 = vector.broadcast %cst_5 : f32 to vector<32x118xf32>
    %24 = arith.mulf %23, %22 : vector<32x118xf32>
    %25 = arith.addf %19, %24 : vector<32x118xf32>
    %26 = vector.extract_strided_slice %0 {offsets = [0, 4], sizes = [32, 118], strides = [1, 1]} : vector<32x128xf32> to vector<32x118xf32>
    %27 = vector.extract_strided_slice %0 {offsets = [0, 7], sizes = [32, 118], strides = [1, 1]} : vector<32x128xf32> to vector<32x118xf32>
    %28 = arith.addf %26, %27 : vector<32x118xf32>
    %cst_6 = arith.constant 1.613730e-01 : f32
    %29 = vector.broadcast %cst_6 : f32 to vector<32x118xf32>
    %30 = arith.mulf %29, %28 : vector<32x118xf32>
    %31 = arith.addf %25, %30 : vector<32x118xf32>
    %32 = vector.extract_strided_slice %0 {offsets = [0, 5], sizes = [32, 118], strides = [1, 1]} : vector<32x128xf32> to vector<32x118xf32>
    %33 = vector.extract_strided_slice %0 {offsets = [0, 6], sizes = [32, 118], strides = [1, 1]} : vector<32x128xf32> to vector<32x118xf32>
    %34 = arith.addf %32, %33 : vector<32x118xf32>
    %cst_7 = arith.constant 0.251681119 : f32
    %35 = vector.broadcast %cst_7 : f32 to vector<32x118xf32>
    %36 = arith.mulf %35, %34 : vector<32x118xf32>
    %37 = arith.addf %31, %36 : vector<32x118xf32>
    %38 = vector.extract_strided_slice %37 {offsets = [0, 0], sizes = [22, 118], strides = [1, 1]} : vector<32x118xf32> to vector<22x118xf32>
    %cst_8 = arith.constant 3.20297899E-4 : f32
    %39 = vector.broadcast %cst_8 : f32 to vector<22x118xf32>
    %40 = arith.mulf %39, %38 : vector<22x118xf32>
    %41 = vector.extract_strided_slice %37 {offsets = [1, 0], sizes = [22, 118], strides = [1, 1]} : vector<32x118xf32> to vector<22x118xf32>
    %42 = vector.extract_strided_slice %37 {offsets = [10, 0], sizes = [22, 118], strides = [1, 1]} : vector<32x118xf32> to vector<22x118xf32>
    %43 = arith.addf %41, %42 : vector<22x118xf32>
    %cst_9 = arith.constant 0.00295564951 : f32
    %44 = vector.broadcast %cst_9 : f32 to vector<22x118xf32>
    %45 = arith.mulf %44, %43 : vector<22x118xf32>
    %46 = arith.addf %40, %45 : vector<22x118xf32>
    %47 = vector.extract_strided_slice %37 {offsets = [2, 0], sizes = [22, 118], strides = [1, 1]} : vector<32x118xf32> to vector<22x118xf32>
    %48 = vector.extract_strided_slice %37 {offsets = [9, 0], sizes = [22, 118], strides = [1, 1]} : vector<32x118xf32> to vector<22x118xf32>
    %49 = arith.addf %47, %48 : vector<22x118xf32>
    %cst_10 = arith.constant 0.0174876731 : f32
    %50 = vector.broadcast %cst_10 : f32 to vector<22x118xf32>
    %51 = arith.mulf %50, %49 : vector<22x118xf32>
    %52 = arith.addf %46, %51 : vector<22x118xf32>
    %53 = vector.extract_strided_slice %37 {offsets = [3, 0], sizes = [22, 118], strides = [1, 1]} : vector<32x118xf32> to vector<22x118xf32>
    %54 = vector.extract_strided_slice %37 {offsets = [8, 0], sizes = [22, 118], strides = [1, 1]} : vector<32x118xf32> to vector<22x118xf32>
    %55 = arith.addf %53, %54 : vector<22x118xf32>
    %cst_11 = arith.constant 0.0663424209 : f32
    %56 = vector.broadcast %cst_11 : f32 to vector<22x118xf32>
    %57 = arith.mulf %56, %55 : vector<22x118xf32>
    %58 = arith.addf %52, %57 : vector<22x118xf32>
    %59 = vector.extract_strided_slice %37 {offsets = [4, 0], sizes = [22, 118], strides = [1, 1]} : vector<32x118xf32> to vector<22x118xf32>
    %60 = vector.extract_strided_slice %37 {offsets = [7, 0], sizes = [22, 118], strides = [1, 1]} : vector<32x118xf32> to vector<22x118xf32>
    %61 = arith.addf %59, %60 : vector<22x118xf32>
    %cst_12 = arith.constant 1.613730e-01 : f32
    %62 = vector.broadcast %cst_12 : f32 to vector<22x118xf32>
    %63 = arith.mulf %62, %61 : vector<22x118xf32>
    %64 = arith.addf %58, %63 : vector<22x118xf32>
    %65 = vector.extract_strided_slice %37 {offsets = [5, 0], sizes = [22, 118], strides = [1, 1]} : vector<32x118xf32> to vector<22x118xf32>
    %66 = vector.extract_strided_slice %37 {offsets = [6, 0], sizes = [22, 118], strides = [1, 1]} : vector<32x118xf32> to vector<22x118xf32>
    %67 = arith.addf %65, %66 : vector<22x118xf32>
    %cst_13 = arith.constant 0.251681119 : f32
    %68 = vector.broadcast %cst_13 : f32 to vector<22x118xf32>
    %69 = arith.mulf %68, %67 : vector<22x118xf32>
    %70 = arith.addf %64, %69 : vector<22x118xf32>
    %71 = vector.extract_strided_slice %1 {offsets = [0, 0], sizes = [32, 118], strides = [1, 1]} : vector<32x128xf32> to vector<32x118xf32>
    %cst_14 = arith.constant 3.20297899E-4 : f32
    %72 = vector.broadcast %cst_14 : f32 to vector<32x118xf32>
    %73 = arith.mulf %72, %71 : vector<32x118xf32>
    %74 = vector.extract_strided_slice %1 {offsets = [0, 1], sizes = [32, 118], strides = [1, 1]} : vector<32x128xf32> to vector<32x118xf32>
    %75 = vector.extract_strided_slice %1 {offsets = [0, 10], sizes = [32, 118], strides = [1, 1]} : vector<32x128xf32> to vector<32x118xf32>
    %76 = arith.addf %74, %75 : vector<32x118xf32>
    %cst_15 = arith.constant 0.00295564951 : f32
    %77 = vector.broadcast %cst_15 : f32 to vector<32x118xf32>
    %78 = arith.mulf %77, %76 : vector<32x118xf32>
    %79 = arith.addf %73, %78 : vector<32x118xf32>
    %80 = vector.extract_strided_slice %1 {offsets = [0, 2], sizes = [32, 118], strides = [1, 1]} : vector<32x128xf32> to vector<32x118xf32>
    %81 = vector.extract_strided_slice %1 {offsets = [0, 9], sizes = [32, 118], strides = [1, 1]} : vector<32x128xf32> to vector<32x118xf32>
    %82 = arith.addf %80, %81 : vector<32x118xf32>
    %cst_16 = arith.constant 0.0174876731 : f32
    %83 = vector.broadcast %cst_16 : f32 to vector<32x118xf32>
    %84 = arith.mulf %83, %82 : vector<32x118xf32>
    %85 = arith.addf %79, %84 : vector<32x118xf32>
    %86 = vector.extract_strided_slice %1 {offsets = [0, 3], sizes = [32, 118], strides = [1, 1]} : vector<32x128xf32> to vector<32x118xf32>
    %87 = vector.extract_strided_slice %1 {offsets = [0, 8], sizes = [32, 118], strides = [1, 1]} : vector<32x128xf32> to vector<32x118xf32>
    %88 = arith.addf %86, %87 : vector<32x118xf32>
    %cst_17 = arith.constant 0.0663424209 : f32
    %89 = vector.broadcast %cst_17 : f32 to vector<32x118xf32>
    %90 = arith.mulf %89, %88 : vector<32x118xf32>
    %91 = arith.addf %85, %90 : vector<32x118xf32>
    %92 = vector.extract_strided_slice %1 {offsets = [0, 4], sizes = [32, 118], strides = [1, 1]} : vector<32x128xf32> to vector<32x118xf32>
    %93 = vector.extract_strided_slice %1 {offsets = [0, 7], sizes = [32, 118], strides = [1, 1]} : vector<32x128xf32> to vector<32x118xf32>
    %94 = arith.addf %92, %93 : vector<32x118xf32>
    %cst_18 = arith.constant 1.613730e-01 : f32
    %95 = vector.broadcast %cst_18 : f32 to vector<32x118xf32>
    %96 = arith.mulf %95, %94 : vector<32x118xf32>
    %97 = arith.addf %91, %96 : vector<32x118xf32>
    %98 = vector.extract_strided_slice %1 {offsets = [0, 5], sizes = [32, 118], strides = [1, 1]} : vector<32x128xf32> to vector<32x118xf32>
    %99 = vector.extract_strided_slice %1 {offsets = [0, 6], sizes = [32, 118], strides = [1, 1]} : vector<32x128xf32> to vector<32x118xf32>
    %100 = arith.addf %98, %99 : vector<32x118xf32>
    %cst_19 = arith.constant 0.251681119 : f32
    %101 = vector.broadcast %cst_19 : f32 to vector<32x118xf32>
    %102 = arith.mulf %101, %100 : vector<32x118xf32>
    %103 = arith.addf %97, %102 : vector<32x118xf32>
    %104 = vector.extract_strided_slice %103 {offsets = [0, 0], sizes = [22, 118], strides = [1, 1]} : vector<32x118xf32> to vector<22x118xf32>
    %cst_20 = arith.constant 3.20297899E-4 : f32
    %105 = vector.broadcast %cst_20 : f32 to vector<22x118xf32>
    %106 = arith.mulf %105, %104 : vector<22x118xf32>
    %107 = vector.extract_strided_slice %103 {offsets = [1, 0], sizes = [22, 118], strides = [1, 1]} : vector<32x118xf32> to vector<22x118xf32>
    %108 = vector.extract_strided_slice %103 {offsets = [10, 0], sizes = [22, 118], strides = [1, 1]} : vector<32x118xf32> to vector<22x118xf32>
    %109 = arith.addf %107, %108 : vector<22x118xf32>
    %cst_21 = arith.constant 0.00295564951 : f32
    %110 = vector.broadcast %cst_21 : f32 to vector<22x118xf32>
    %111 = arith.mulf %110, %109 : vector<22x118xf32>
    %112 = arith.addf %106, %111 : vector<22x118xf32>
    %113 = vector.extract_strided_slice %103 {offsets = [2, 0], sizes = [22, 118], strides = [1, 1]} : vector<32x118xf32> to vector<22x118xf32>
    %114 = vector.extract_strided_slice %103 {offsets = [9, 0], sizes = [22, 118], strides = [1, 1]} : vector<32x118xf32> to vector<22x118xf32>
    %115 = arith.addf %113, %114 : vector<22x118xf32>
    %cst_22 = arith.constant 0.0174876731 : f32
    %116 = vector.broadcast %cst_22 : f32 to vector<22x118xf32>
    %117 = arith.mulf %116, %115 : vector<22x118xf32>
    %118 = arith.addf %112, %117 : vector<22x118xf32>
    %119 = vector.extract_strided_slice %103 {offsets = [3, 0], sizes = [22, 118], strides = [1, 1]} : vector<32x118xf32> to vector<22x118xf32>
    %120 = vector.extract_strided_slice %103 {offsets = [8, 0], sizes = [22, 118], strides = [1, 1]} : vector<32x118xf32> to vector<22x118xf32>
    %121 = arith.addf %119, %120 : vector<22x118xf32>
    %cst_23 = arith.constant 0.0663424209 : f32
    %122 = vector.broadcast %cst_23 : f32 to vector<22x118xf32>
    %123 = arith.mulf %122, %121 : vector<22x118xf32>
    %124 = arith.addf %118, %123 : vector<22x118xf32>
    %125 = vector.extract_strided_slice %103 {offsets = [4, 0], sizes = [22, 118], strides = [1, 1]} : vector<32x118xf32> to vector<22x118xf32>
    %126 = vector.extract_strided_slice %103 {offsets = [7, 0], sizes = [22, 118], strides = [1, 1]} : vector<32x118xf32> to vector<22x118xf32>
    %127 = arith.addf %125, %126 : vector<22x118xf32>
    %cst_24 = arith.constant 1.613730e-01 : f32
    %128 = vector.broadcast %cst_24 : f32 to vector<22x118xf32>
    %129 = arith.mulf %128, %127 : vector<22x118xf32>
    %130 = arith.addf %124, %129 : vector<22x118xf32>
    %131 = vector.extract_strided_slice %103 {offsets = [5, 0], sizes = [22, 118], strides = [1, 1]} : vector<32x118xf32> to vector<22x118xf32>
    %132 = vector.extract_strided_slice %103 {offsets = [6, 0], sizes = [22, 118], strides = [1, 1]} : vector<32x118xf32> to vector<22x118xf32>
    %133 = arith.addf %131, %132 : vector<22x118xf32>
    %cst_25 = arith.constant 0.251681119 : f32
    %134 = vector.broadcast %cst_25 : f32 to vector<22x118xf32>
    %135 = arith.mulf %134, %133 : vector<22x118xf32>
    %136 = arith.addf %130, %135 : vector<22x118xf32>
    %137 = vector.extract_strided_slice %2 {offsets = [0, 0], sizes = [32, 118], strides = [1, 1]} : vector<32x128xf32> to vector<32x118xf32>
    %cst_26 = arith.constant 3.20297899E-4 : f32
    %138 = vector.broadcast %cst_26 : f32 to vector<32x118xf32>
    %139 = arith.mulf %138, %137 : vector<32x118xf32>
    %140 = vector.extract_strided_slice %2 {offsets = [0, 1], sizes = [32, 118], strides = [1, 1]} : vector<32x128xf32> to vector<32x118xf32>
    %141 = vector.extract_strided_slice %2 {offsets = [0, 10], sizes = [32, 118], strides = [1, 1]} : vector<32x128xf32> to vector<32x118xf32>
    %142 = arith.addf %140, %141 : vector<32x118xf32>
    %cst_27 = arith.constant 0.00295564951 : f32
    %143 = vector.broadcast %cst_27 : f32 to vector<32x118xf32>
    %144 = arith.mulf %143, %142 : vector<32x118xf32>
    %145 = arith.addf %139, %144 : vector<32x118xf32>
    %146 = vector.extract_strided_slice %2 {offsets = [0, 2], sizes = [32, 118], strides = [1, 1]} : vector<32x128xf32> to vector<32x118xf32>
    %147 = vector.extract_strided_slice %2 {offsets = [0, 9], sizes = [32, 118], strides = [1, 1]} : vector<32x128xf32> to vector<32x118xf32>
    %148 = arith.addf %146, %147 : vector<32x118xf32>
    %cst_28 = arith.constant 0.0174876731 : f32
    %149 = vector.broadcast %cst_28 : f32 to vector<32x118xf32>
    %150 = arith.mulf %149, %148 : vector<32x118xf32>
    %151 = arith.addf %145, %150 : vector<32x118xf32>
    %152 = vector.extract_strided_slice %2 {offsets = [0, 3], sizes = [32, 118], strides = [1, 1]} : vector<32x128xf32> to vector<32x118xf32>
    %153 = vector.extract_strided_slice %2 {offsets = [0, 8], sizes = [32, 118], strides = [1, 1]} : vector<32x128xf32> to vector<32x118xf32>
    %154 = arith.addf %152, %153 : vector<32x118xf32>
    %cst_29 = arith.constant 0.0663424209 : f32
    %155 = vector.broadcast %cst_29 : f32 to vector<32x118xf32>
    %156 = arith.mulf %155, %154 : vector<32x118xf32>
    %157 = arith.addf %151, %156 : vector<32x118xf32>
    %158 = vector.extract_strided_slice %2 {offsets = [0, 4], sizes = [32, 118], strides = [1, 1]} : vector<32x128xf32> to vector<32x118xf32>
    %159 = vector.extract_strided_slice %2 {offsets = [0, 7], sizes = [32, 118], strides = [1, 1]} : vector<32x128xf32> to vector<32x118xf32>
    %160 = arith.addf %158, %159 : vector<32x118xf32>
    %cst_30 = arith.constant 1.613730e-01 : f32
    %161 = vector.broadcast %cst_30 : f32 to vector<32x118xf32>
    %162 = arith.mulf %161, %160 : vector<32x118xf32>
    %163 = arith.addf %157, %162 : vector<32x118xf32>
    %164 = vector.extract_strided_slice %2 {offsets = [0, 5], sizes = [32, 118], strides = [1, 1]} : vector<32x128xf32> to vector<32x118xf32>
    %165 = vector.extract_strided_slice %2 {offsets = [0, 6], sizes = [32, 118], strides = [1, 1]} : vector<32x128xf32> to vector<32x118xf32>
    %166 = arith.addf %164, %165 : vector<32x118xf32>
    %cst_31 = arith.constant 0.251681119 : f32
    %167 = vector.broadcast %cst_31 : f32 to vector<32x118xf32>
    %168 = arith.mulf %167, %166 : vector<32x118xf32>
    %169 = arith.addf %163, %168 : vector<32x118xf32>
    %170 = vector.extract_strided_slice %169 {offsets = [0, 0], sizes = [22, 118], strides = [1, 1]} : vector<32x118xf32> to vector<22x118xf32>
    %cst_32 = arith.constant 3.20297899E-4 : f32
    %171 = vector.broadcast %cst_32 : f32 to vector<22x118xf32>
    %172 = arith.mulf %171, %170 : vector<22x118xf32>
    %173 = vector.extract_strided_slice %169 {offsets = [1, 0], sizes = [22, 118], strides = [1, 1]} : vector<32x118xf32> to vector<22x118xf32>
    %174 = vector.extract_strided_slice %169 {offsets = [10, 0], sizes = [22, 118], strides = [1, 1]} : vector<32x118xf32> to vector<22x118xf32>
    %175 = arith.addf %173, %174 : vector<22x118xf32>
    %cst_33 = arith.constant 0.00295564951 : f32
    %176 = vector.broadcast %cst_33 : f32 to vector<22x118xf32>
    %177 = arith.mulf %176, %175 : vector<22x118xf32>
    %178 = arith.addf %172, %177 : vector<22x118xf32>
    %179 = vector.extract_strided_slice %169 {offsets = [2, 0], sizes = [22, 118], strides = [1, 1]} : vector<32x118xf32> to vector<22x118xf32>
    %180 = vector.extract_strided_slice %169 {offsets = [9, 0], sizes = [22, 118], strides = [1, 1]} : vector<32x118xf32> to vector<22x118xf32>
    %181 = arith.addf %179, %180 : vector<22x118xf32>
    %cst_34 = arith.constant 0.0174876731 : f32
    %182 = vector.broadcast %cst_34 : f32 to vector<22x118xf32>
    %183 = arith.mulf %182, %181 : vector<22x118xf32>
    %184 = arith.addf %178, %183 : vector<22x118xf32>
    %185 = vector.extract_strided_slice %169 {offsets = [3, 0], sizes = [22, 118], strides = [1, 1]} : vector<32x118xf32> to vector<22x118xf32>
    %186 = vector.extract_strided_slice %169 {offsets = [8, 0], sizes = [22, 118], strides = [1, 1]} : vector<32x118xf32> to vector<22x118xf32>
    %187 = arith.addf %185, %186 : vector<22x118xf32>
    %cst_35 = arith.constant 0.0663424209 : f32
    %188 = vector.broadcast %cst_35 : f32 to vector<22x118xf32>
    %189 = arith.mulf %188, %187 : vector<22x118xf32>
    %190 = arith.addf %184, %189 : vector<22x118xf32>
    %191 = vector.extract_strided_slice %169 {offsets = [4, 0], sizes = [22, 118], strides = [1, 1]} : vector<32x118xf32> to vector<22x118xf32>
    %192 = vector.extract_strided_slice %169 {offsets = [7, 0], sizes = [22, 118], strides = [1, 1]} : vector<32x118xf32> to vector<22x118xf32>
    %193 = arith.addf %191, %192 : vector<22x118xf32>
    %cst_36 = arith.constant 1.613730e-01 : f32
    %194 = vector.broadcast %cst_36 : f32 to vector<22x118xf32>
    %195 = arith.mulf %194, %193 : vector<22x118xf32>
    %196 = arith.addf %190, %195 : vector<22x118xf32>
    %197 = vector.extract_strided_slice %169 {offsets = [5, 0], sizes = [22, 118], strides = [1, 1]} : vector<32x118xf32> to vector<22x118xf32>
    %198 = vector.extract_strided_slice %169 {offsets = [6, 0], sizes = [22, 118], strides = [1, 1]} : vector<32x118xf32> to vector<22x118xf32>
    %199 = arith.addf %197, %198 : vector<22x118xf32>
    %cst_37 = arith.constant 0.251681119 : f32
    %200 = vector.broadcast %cst_37 : f32 to vector<22x118xf32>
    %201 = arith.mulf %200, %199 : vector<22x118xf32>
    %202 = arith.addf %196, %201 : vector<22x118xf32>
    %203 = vector.extract_strided_slice %3 {offsets = [0, 0], sizes = [32, 118], strides = [1, 1]} : vector<32x128xf32> to vector<32x118xf32>
    %cst_38 = arith.constant 3.20297899E-4 : f32
    %204 = vector.broadcast %cst_38 : f32 to vector<32x118xf32>
    %205 = arith.mulf %204, %203 : vector<32x118xf32>
    %206 = vector.extract_strided_slice %3 {offsets = [0, 1], sizes = [32, 118], strides = [1, 1]} : vector<32x128xf32> to vector<32x118xf32>
    %207 = vector.extract_strided_slice %3 {offsets = [0, 10], sizes = [32, 118], strides = [1, 1]} : vector<32x128xf32> to vector<32x118xf32>
    %208 = arith.addf %206, %207 : vector<32x118xf32>
    %cst_39 = arith.constant 0.00295564951 : f32
    %209 = vector.broadcast %cst_39 : f32 to vector<32x118xf32>
    %210 = arith.mulf %209, %208 : vector<32x118xf32>
    %211 = arith.addf %205, %210 : vector<32x118xf32>
    %212 = vector.extract_strided_slice %3 {offsets = [0, 2], sizes = [32, 118], strides = [1, 1]} : vector<32x128xf32> to vector<32x118xf32>
    %213 = vector.extract_strided_slice %3 {offsets = [0, 9], sizes = [32, 118], strides = [1, 1]} : vector<32x128xf32> to vector<32x118xf32>
    %214 = arith.addf %212, %213 : vector<32x118xf32>
    %cst_40 = arith.constant 0.0174876731 : f32
    %215 = vector.broadcast %cst_40 : f32 to vector<32x118xf32>
    %216 = arith.mulf %215, %214 : vector<32x118xf32>
    %217 = arith.addf %211, %216 : vector<32x118xf32>
    %218 = vector.extract_strided_slice %3 {offsets = [0, 3], sizes = [32, 118], strides = [1, 1]} : vector<32x128xf32> to vector<32x118xf32>
    %219 = vector.extract_strided_slice %3 {offsets = [0, 8], sizes = [32, 118], strides = [1, 1]} : vector<32x128xf32> to vector<32x118xf32>
    %220 = arith.addf %218, %219 : vector<32x118xf32>
    %cst_41 = arith.constant 0.0663424209 : f32
    %221 = vector.broadcast %cst_41 : f32 to vector<32x118xf32>
    %222 = arith.mulf %221, %220 : vector<32x118xf32>
    %223 = arith.addf %217, %222 : vector<32x118xf32>
    %224 = vector.extract_strided_slice %3 {offsets = [0, 4], sizes = [32, 118], strides = [1, 1]} : vector<32x128xf32> to vector<32x118xf32>
    %225 = vector.extract_strided_slice %3 {offsets = [0, 7], sizes = [32, 118], strides = [1, 1]} : vector<32x128xf32> to vector<32x118xf32>
    %226 = arith.addf %224, %225 : vector<32x118xf32>
    %cst_42 = arith.constant 1.613730e-01 : f32
    %227 = vector.broadcast %cst_42 : f32 to vector<32x118xf32>
    %228 = arith.mulf %227, %226 : vector<32x118xf32>
    %229 = arith.addf %223, %228 : vector<32x118xf32>
    %230 = vector.extract_strided_slice %3 {offsets = [0, 5], sizes = [32, 118], strides = [1, 1]} : vector<32x128xf32> to vector<32x118xf32>
    %231 = vector.extract_strided_slice %3 {offsets = [0, 6], sizes = [32, 118], strides = [1, 1]} : vector<32x128xf32> to vector<32x118xf32>
    %232 = arith.addf %230, %231 : vector<32x118xf32>
    %cst_43 = arith.constant 0.251681119 : f32
    %233 = vector.broadcast %cst_43 : f32 to vector<32x118xf32>
    %234 = arith.mulf %233, %232 : vector<32x118xf32>
    %235 = arith.addf %229, %234 : vector<32x118xf32>
    %236 = vector.extract_strided_slice %235 {offsets = [0, 0], sizes = [22, 118], strides = [1, 1]} : vector<32x118xf32> to vector<22x118xf32>
    %cst_44 = arith.constant 3.20297899E-4 : f32
    %237 = vector.broadcast %cst_44 : f32 to vector<22x118xf32>
    %238 = arith.mulf %237, %236 : vector<22x118xf32>
    %239 = vector.extract_strided_slice %235 {offsets = [1, 0], sizes = [22, 118], strides = [1, 1]} : vector<32x118xf32> to vector<22x118xf32>
    %240 = vector.extract_strided_slice %235 {offsets = [10, 0], sizes = [22, 118], strides = [1, 1]} : vector<32x118xf32> to vector<22x118xf32>
    %241 = arith.addf %239, %240 : vector<22x118xf32>
    %cst_45 = arith.constant 0.00295564951 : f32
    %242 = vector.broadcast %cst_45 : f32 to vector<22x118xf32>
    %243 = arith.mulf %242, %241 : vector<22x118xf32>
    %244 = arith.addf %238, %243 : vector<22x118xf32>
    %245 = vector.extract_strided_slice %235 {offsets = [2, 0], sizes = [22, 118], strides = [1, 1]} : vector<32x118xf32> to vector<22x118xf32>
    %246 = vector.extract_strided_slice %235 {offsets = [9, 0], sizes = [22, 118], strides = [1, 1]} : vector<32x118xf32> to vector<22x118xf32>
    %247 = arith.addf %245, %246 : vector<22x118xf32>
    %cst_46 = arith.constant 0.0174876731 : f32
    %248 = vector.broadcast %cst_46 : f32 to vector<22x118xf32>
    %249 = arith.mulf %248, %247 : vector<22x118xf32>
    %250 = arith.addf %244, %249 : vector<22x118xf32>
    %251 = vector.extract_strided_slice %235 {offsets = [3, 0], sizes = [22, 118], strides = [1, 1]} : vector<32x118xf32> to vector<22x118xf32>
    %252 = vector.extract_strided_slice %235 {offsets = [8, 0], sizes = [22, 118], strides = [1, 1]} : vector<32x118xf32> to vector<22x118xf32>
    %253 = arith.addf %251, %252 : vector<22x118xf32>
    %cst_47 = arith.constant 0.0663424209 : f32
    %254 = vector.broadcast %cst_47 : f32 to vector<22x118xf32>
    %255 = arith.mulf %254, %253 : vector<22x118xf32>
    %256 = arith.addf %250, %255 : vector<22x118xf32>
    %257 = vector.extract_strided_slice %235 {offsets = [4, 0], sizes = [22, 118], strides = [1, 1]} : vector<32x118xf32> to vector<22x118xf32>
    %258 = vector.extract_strided_slice %235 {offsets = [7, 0], sizes = [22, 118], strides = [1, 1]} : vector<32x118xf32> to vector<22x118xf32>
    %259 = arith.addf %257, %258 : vector<22x118xf32>
    %cst_48 = arith.constant 1.613730e-01 : f32
    %260 = vector.broadcast %cst_48 : f32 to vector<22x118xf32>
    %261 = arith.mulf %260, %259 : vector<22x118xf32>
    %262 = arith.addf %256, %261 : vector<22x118xf32>
    %263 = vector.extract_strided_slice %235 {offsets = [5, 0], sizes = [22, 118], strides = [1, 1]} : vector<32x118xf32> to vector<22x118xf32>
    %264 = vector.extract_strided_slice %235 {offsets = [6, 0], sizes = [22, 118], strides = [1, 1]} : vector<32x118xf32> to vector<22x118xf32>
    %265 = arith.addf %263, %264 : vector<22x118xf32>
    %cst_49 = arith.constant 0.251681119 : f32
    %266 = vector.broadcast %cst_49 : f32 to vector<22x118xf32>
    %267 = arith.mulf %266, %265 : vector<22x118xf32>
    %268 = arith.addf %262, %267 : vector<22x118xf32>
    %269 = vector.extract_strided_slice %4 {offsets = [0, 0], sizes = [32, 118], strides = [1, 1]} : vector<32x128xf32> to vector<32x118xf32>
    %cst_50 = arith.constant 3.20297899E-4 : f32
    %270 = vector.broadcast %cst_50 : f32 to vector<32x118xf32>
    %271 = arith.mulf %270, %269 : vector<32x118xf32>
    %272 = vector.extract_strided_slice %4 {offsets = [0, 1], sizes = [32, 118], strides = [1, 1]} : vector<32x128xf32> to vector<32x118xf32>
    %273 = vector.extract_strided_slice %4 {offsets = [0, 10], sizes = [32, 118], strides = [1, 1]} : vector<32x128xf32> to vector<32x118xf32>
    %274 = arith.addf %272, %273 : vector<32x118xf32>
    %cst_51 = arith.constant 0.00295564951 : f32
    %275 = vector.broadcast %cst_51 : f32 to vector<32x118xf32>
    %276 = arith.mulf %275, %274 : vector<32x118xf32>
    %277 = arith.addf %271, %276 : vector<32x118xf32>
    %278 = vector.extract_strided_slice %4 {offsets = [0, 2], sizes = [32, 118], strides = [1, 1]} : vector<32x128xf32> to vector<32x118xf32>
    %279 = vector.extract_strided_slice %4 {offsets = [0, 9], sizes = [32, 118], strides = [1, 1]} : vector<32x128xf32> to vector<32x118xf32>
    %280 = arith.addf %278, %279 : vector<32x118xf32>
    %cst_52 = arith.constant 0.0174876731 : f32
    %281 = vector.broadcast %cst_52 : f32 to vector<32x118xf32>
    %282 = arith.mulf %281, %280 : vector<32x118xf32>
    %283 = arith.addf %277, %282 : vector<32x118xf32>
    %284 = vector.extract_strided_slice %4 {offsets = [0, 3], sizes = [32, 118], strides = [1, 1]} : vector<32x128xf32> to vector<32x118xf32>
    %285 = vector.extract_strided_slice %4 {offsets = [0, 8], sizes = [32, 118], strides = [1, 1]} : vector<32x128xf32> to vector<32x118xf32>
    %286 = arith.addf %284, %285 : vector<32x118xf32>
    %cst_53 = arith.constant 0.0663424209 : f32
    %287 = vector.broadcast %cst_53 : f32 to vector<32x118xf32>
    %288 = arith.mulf %287, %286 : vector<32x118xf32>
    %289 = arith.addf %283, %288 : vector<32x118xf32>
    %290 = vector.extract_strided_slice %4 {offsets = [0, 4], sizes = [32, 118], strides = [1, 1]} : vector<32x128xf32> to vector<32x118xf32>
    %291 = vector.extract_strided_slice %4 {offsets = [0, 7], sizes = [32, 118], strides = [1, 1]} : vector<32x128xf32> to vector<32x118xf32>
    %292 = arith.addf %290, %291 : vector<32x118xf32>
    %cst_54 = arith.constant 1.613730e-01 : f32
    %293 = vector.broadcast %cst_54 : f32 to vector<32x118xf32>
    %294 = arith.mulf %293, %292 : vector<32x118xf32>
    %295 = arith.addf %289, %294 : vector<32x118xf32>
    %296 = vector.extract_strided_slice %4 {offsets = [0, 5], sizes = [32, 118], strides = [1, 1]} : vector<32x128xf32> to vector<32x118xf32>
    %297 = vector.extract_strided_slice %4 {offsets = [0, 6], sizes = [32, 118], strides = [1, 1]} : vector<32x128xf32> to vector<32x118xf32>
    %298 = arith.addf %296, %297 : vector<32x118xf32>
    %cst_55 = arith.constant 0.251681119 : f32
    %299 = vector.broadcast %cst_55 : f32 to vector<32x118xf32>
    %300 = arith.mulf %299, %298 : vector<32x118xf32>
    %301 = arith.addf %295, %300 : vector<32x118xf32>
    %302 = vector.extract_strided_slice %301 {offsets = [0, 0], sizes = [22, 118], strides = [1, 1]} : vector<32x118xf32> to vector<22x118xf32>
    %cst_56 = arith.constant 3.20297899E-4 : f32
    %303 = vector.broadcast %cst_56 : f32 to vector<22x118xf32>
    %304 = arith.mulf %303, %302 : vector<22x118xf32>
    %305 = vector.extract_strided_slice %301 {offsets = [1, 0], sizes = [22, 118], strides = [1, 1]} : vector<32x118xf32> to vector<22x118xf32>
    %306 = vector.extract_strided_slice %301 {offsets = [10, 0], sizes = [22, 118], strides = [1, 1]} : vector<32x118xf32> to vector<22x118xf32>
    %307 = arith.addf %305, %306 : vector<22x118xf32>
    %cst_57 = arith.constant 0.00295564951 : f32
    %308 = vector.broadcast %cst_57 : f32 to vector<22x118xf32>
    %309 = arith.mulf %308, %307 : vector<22x118xf32>
    %310 = arith.addf %304, %309 : vector<22x118xf32>
    %311 = vector.extract_strided_slice %301 {offsets = [2, 0], sizes = [22, 118], strides = [1, 1]} : vector<32x118xf32> to vector<22x118xf32>
    %312 = vector.extract_strided_slice %301 {offsets = [9, 0], sizes = [22, 118], strides = [1, 1]} : vector<32x118xf32> to vector<22x118xf32>
    %313 = arith.addf %311, %312 : vector<22x118xf32>
    %cst_58 = arith.constant 0.0174876731 : f32
    %314 = vector.broadcast %cst_58 : f32 to vector<22x118xf32>
    %315 = arith.mulf %314, %313 : vector<22x118xf32>
    %316 = arith.addf %310, %315 : vector<22x118xf32>
    %317 = vector.extract_strided_slice %301 {offsets = [3, 0], sizes = [22, 118], strides = [1, 1]} : vector<32x118xf32> to vector<22x118xf32>
    %318 = vector.extract_strided_slice %301 {offsets = [8, 0], sizes = [22, 118], strides = [1, 1]} : vector<32x118xf32> to vector<22x118xf32>
    %319 = arith.addf %317, %318 : vector<22x118xf32>
    %cst_59 = arith.constant 0.0663424209 : f32
    %320 = vector.broadcast %cst_59 : f32 to vector<22x118xf32>
    %321 = arith.mulf %320, %319 : vector<22x118xf32>
    %322 = arith.addf %316, %321 : vector<22x118xf32>
    %323 = vector.extract_strided_slice %301 {offsets = [4, 0], sizes = [22, 118], strides = [1, 1]} : vector<32x118xf32> to vector<22x118xf32>
    %324 = vector.extract_strided_slice %301 {offsets = [7, 0], sizes = [22, 118], strides = [1, 1]} : vector<32x118xf32> to vector<22x118xf32>
    %325 = arith.addf %323, %324 : vector<22x118xf32>
    %cst_60 = arith.constant 1.613730e-01 : f32
    %326 = vector.broadcast %cst_60 : f32 to vector<22x118xf32>
    %327 = arith.mulf %326, %325 : vector<22x118xf32>
    %328 = arith.addf %322, %327 : vector<22x118xf32>
    %329 = vector.extract_strided_slice %301 {offsets = [5, 0], sizes = [22, 118], strides = [1, 1]} : vector<32x118xf32> to vector<22x118xf32>
    %330 = vector.extract_strided_slice %301 {offsets = [6, 0], sizes = [22, 118], strides = [1, 1]} : vector<32x118xf32> to vector<22x118xf32>
    %331 = arith.addf %329, %330 : vector<22x118xf32>
    %cst_61 = arith.constant 0.251681119 : f32
    %332 = vector.broadcast %cst_61 : f32 to vector<22x118xf32>
    %333 = arith.mulf %332, %331 : vector<22x118xf32>
    %334 = arith.addf %328, %333 : vector<22x118xf32>
    %335 = arith.mulf %70, %70 : vector<22x118xf32>
    %336 = arith.mulf %136, %136 : vector<22x118xf32>
    %337 = arith.mulf %70, %136 : vector<22x118xf32>
    %338 = arith.subf %202, %335 : vector<22x118xf32>
    %339 = arith.subf %268, %336 : vector<22x118xf32>
    %340 = arith.subf %334, %337 : vector<22x118xf32>
    %cst_62 = arith.constant 2.000000e+00 : f32
    %341 = vector.broadcast %cst_62 : f32 to vector<22x118xf32>
    %342 = arith.mulf %341, %337 : vector<22x118xf32>
    %cst_63 = arith.constant 9.99999974E-5 : f32
    %343 = vector.broadcast %cst_63 : f32 to vector<22x118xf32>
    %344 = arith.addf %342, %343 : vector<22x118xf32>
    %cst_64 = arith.constant 2.000000e+00 : f32
    %345 = vector.broadcast %cst_64 : f32 to vector<22x118xf32>
    %346 = arith.mulf %345, %340 : vector<22x118xf32>
    %cst_65 = arith.constant 8.99999984E-4 : f32
    %347 = vector.broadcast %cst_65 : f32 to vector<22x118xf32>
    %348 = arith.addf %346, %347 : vector<22x118xf32>
    %349 = arith.mulf %344, %348 : vector<22x118xf32>
    %350 = arith.addf %335, %336 : vector<22x118xf32>
    %cst_66 = arith.constant 9.99999974E-5 : f32
    %351 = vector.broadcast %cst_66 : f32 to vector<22x118xf32>
    %352 = arith.addf %350, %351 : vector<22x118xf32>
    %353 = arith.addf %338, %339 : vector<22x118xf32>
    %cst_67 = arith.constant 8.99999984E-4 : f32
    %354 = vector.broadcast %cst_67 : f32 to vector<22x118xf32>
    %355 = arith.addf %353, %354 : vector<22x118xf32>
    %356 = arith.mulf %352, %355 : vector<22x118xf32>
    %357 = tpu.reciprocal %356 {approx = true} : vector<22x118xf32> -> vector<22x118xf32>
    %358 = arith.mulf %349, %357 : vector<22x118xf32>
    %c0_68 = arith.constant 0 : index
    %c0_69 = arith.constant 0 : index
    %359 = vector.load %arg3[%c0_68, %c0_69] : memref<32x1xf32, #tpu.memory_space<vmem>>, vector<32x1xf32>
    %360 = vector.extract_strided_slice %359 {offsets = [0, 0], sizes = [22, 1], strides = [1, 1]} : vector<32x1xf32> to vector<22x1xf32>
    %c0_70 = arith.constant 0 : index
    %c0_71 = arith.constant 0 : index
    %361 = vector.load %arg4[%c0_70, %c0_71] : memref<1x128xf32, #tpu.memory_space<vmem>>, vector<1x128xf32>
    %362 = vector.extract_strided_slice %361 {offsets = [0, 0], sizes = [1, 118], strides = [1, 1]} : vector<1x128xf32> to vector<1x118xf32>
    %363 = vector.broadcast %360 : vector<22x1xf32> to vector<22x118xf32>
    %364 = arith.mulf %358, %363 : vector<22x118xf32>
    %365 = vector.broadcast %362 : vector<1x118xf32> to vector<22x118xf32>
    %366 = arith.mulf %364, %365 : vector<22x118xf32>
    %367 = vector.shape_cast %366 : vector<22x118xf32> to vector<1x22x118xf32>
    %cst_72 = arith.constant dense<0.000000e+00> : vector<1xf32>
    %368 = vector.multi_reduction <add>, %367, %cst_72 [1, 2] : vector<1x22x118xf32> to vector<1xf32>
    %369 = vector.shape_cast %368 : vector<1xf32> to vector<1x1x1xf32>
    %370 = vector.extract %369[0, 0, 0] : f32 from vector<1x1x1xf32>
    %371 = vector.broadcast %370 : f32 to vector<1x8x128xf32>
    %c0_73 = arith.constant 0 : index
    %c0_74 = arith.constant 0 : index
    %c0_75 = arith.constant 0 : index
    %372 = vector.load %arg5[%c0_73, %c0_74, %c0_75] : memref<1x8x128xf32, #tpu.memory_space<vmem>>, vector<1x8x128xf32>
    tpu.vector_store %arg5[%c0_73, %c0_74, %c0_75], %371 {strides = array<i32>} : memref<1x8x128xf32, #tpu.memory_space<vmem>>, vector<1x8x128xf32>,
    return
  }
  func.func @transform_0(%arg0: i32) -> (i32, i32) {
    %c0_i32 = arith.constant 0 : i32
    %c0_i32_0 = arith.constant 0 : i32
    return %arg0, %c0_i32 : i32, i32
  }
  func.func @transform_1(%arg0: i32) -> (i32, i32) {
    %c0_i32 = arith.constant 0 : i32
    %c0_i32_0 = arith.constant 0 : i32
    return %arg0, %c0_i32 : i32, i32
  }
  func.func @transform_2(%arg0: i32) -> (i32, i32) {
    %c0_i32 = arith.constant 0 : i32
    %c0_i32_0 = arith.constant 0 : i32
    return %arg0, %c0_i32 : i32, i32
  }
  func.func @transform_3(%arg0: i32) -> (i32, i32) {
    %c0_i32 = arith.constant 0 : i32
    %c0_i32_0 = arith.constant 0 : i32
    %c0_i32_1 = arith.constant 0 : i32
    return %c0_i32, %c0_i32_0 : i32, i32
  }
  func.func @transform_4(%arg0: i32) -> (i32, i32, i32) {
    %c0_i32 = arith.constant 0 : i32
    %c0_i32_0 = arith.constant 0 : i32
    %c0_i32_1 = arith.constant 0 : i32
    return %arg0, %c0_i32, %c0_i32_0 : i32, i32, i32
  }
}

</mosaic_0001>

<llo_original>
// kernel: ssim_loss.1
$region0: #{ssim_loss.1}
  #allocation0 [shape = 'u32[]', space=smem, size = 0x4, offset = 0x4, fixed_abs, tag = 'smem constant byte address 0x4 - core index']
  #allocation1 [shape = 'u32[72,128]{1,0:T(1,128)}', space=vmem, size = 0x9000, scoped, tag = 'internal scratch']
  %s0 = inlined_call_operand.vmem [shape: f32[64,128], index: 0, kind: input, shape index: {}]
  %s1 = inlined_call_operand.vmem [shape: f32[64,128], index: 1, kind: input, shape index: {}]
  %s2 = inlined_call_operand.vmem [shape: f32[64,1], index: 2, kind: input, shape index: {}]
  %s3 = inlined_call_operand.vmem [shape: f32[1,128], index: 3, kind: input, shape index: {}]
  %s4 = inlined_call_operand.vmem [shape: f32[2,8,128], index: 4, kind: output, shape index: {}]
  %s5 = sld [smem:[#allocation0]]
  $region49: #{ssim_loss.1} parent=0
    _
  %s7 = ssub.s32 1, %s5
  %s8 = scalar_select 0, %s7, %s5
  loop: start=0, step=1, limit=4
  $region2: #{ssim_loss.1} parent=0 // loop_pre_header
    _
  $region3: #{ssim_loss.1} parent=0 // loop_header
    %s10 = sphi 0, %s14
    %p11 = scmp.ge.s32.totalorder %s10, 4
    %s20 = sphi 0, %s22
    %s23 = sphi 0, %s20
    %s24 = sphi 0, %s23
    %s40 = sphi 0, %s24
    %s46 = sphi 0, %s48
    %s49 = sphi 0, %s46
    %s50 = sphi 0, %s49
    %s66 = sphi 0, %s50
    %s72 = sphi 0, %s74
    %s75 = sphi 0, %s72
    %s76 = sphi 0, %s75
    %s92 = sphi 0, %s76
    %s96 = sphi 0, %s96
    %s98 = sphi 0, %s96
    %s99 = sphi 0, %s98
    %s113 = sphi 0, %s99
    %s119 = sphi 0, %s121
    %s122 = sphi 0, %s119
    %s123 = sphi 0, %s122
    %s139 = sphi 0, %s123
  $region4: #{ssim_loss.1} parent=0 // loop_header_branch
    %13 = sbr.rel (%p11) target = $region8
  $region5: #{ssim_loss.1} parent=0 // loop_body
    %s15 = ssub.s32 %s10, 1
    %s16 = ssub.s32 %s10, 2
    %s17 = sadd.s32 %s10, 1
    %s18 = ssub.s32 %s10, %s17
    %p19 = scmp.eq.s32.totalorder %s18, 0
    %s21 = sadd.s32 %s20, 1
    %s22 = scalar_select %p19, %s20, %s21
    %p25 = pneg %p19
    %p26 = scmp.eq.s32.totalorder %s10, 1
    %p27 = por %p25, %p26
    %p28 = scmp.ne.s32.totalorder %s20, %s23
    %p29 = scmp.eq.s32.totalorder %s10, 0
    %p30 = por %p28, %p29
    %p31 = scmp.ne.s32.totalorder %s20, %s23
    %p32 = scmp.eq.s32.totalorder %s15, 1
    %p33 = por %p31, %p32
    %p34 = scmp.ne.s32.totalorder %s23, %s24
    %p35 = scmp.eq.s32.totalorder %s15, 0
    %p36 = por %p34, %p35
    %p37 = scmp.ne.s32.totalorder %s23, %s24
    %p38 = scmp.eq.s32.totalorder %s16, 1
    %p39 = por %p37, %p38
    %p41 = scmp.ne.s32.totalorder %s24, %s40
    %p42 = scmp.eq.s32.totalorder %s16, 0
    %p43 = por %p41, %p42
    %s44 = ssub.s32 %s10, %s17
    %p45 = scmp.eq.s32.totalorder %s44, 0
    %s47 = sadd.s32 %s46, 1
    %s48 = scalar_select %p45, %s46, %s47
    %p51 = pneg %p45
    %p52 = scmp.eq.s32.totalorder %s10, 1
    %p53 = por %p51, %p52
    %p54 = scmp.ne.s32.totalorder %s46, %s49
    %p55 = scmp.eq.s32.totalorder %s10, 0
    %p56 = por %p54, %p55
    %p57 = scmp.ne.s32.totalorder %s46, %s49
    %p58 = scmp.eq.s32.totalorder %s15, 1
    %p59 = por %p57, %p58
    %p60 = scmp.ne.s32.totalorder %s49, %s50
    %p61 = scmp.eq.s32.totalorder %s15, 0
    %p62 = por %p60, %p61
    %p63 = scmp.ne.s32.totalorder %s49, %s50
    %p64 = scmp.eq.s32.totalorder %s16, 1
    %p65 = por %p63, %p64
    %p67 = scmp.ne.s32.totalorder %s50, %s66
    %p68 = scmp.eq.s32.totalorder %s16, 0
    %p69 = por %p67, %p68
    %s70 = ssub.s32 %s10, %s17
    %p71 = scmp.eq.s32.totalorder %s70, 0
    %s73 = sadd.s32 %s72, 1
    %s74 = scalar_select %p71, %s72, %s73
    %p77 = pneg %p71
    %p78 = scmp.eq.s32.totalorder %s10, 1
    %p79 = por %p77, %p78
    %p80 = scmp.ne.s32.totalorder %s72, %s75
    %p81 = scmp.eq.s32.totalorder %s10, 0
    %p82 = por %p80, %p81
    %p83 = scmp.ne.s32.totalorder %s72, %s75
    %p84 = scmp.eq.s32.totalorder %s15, 1
    %p85 = por %p83, %p84
    %p86 = scmp.ne.s32.totalorder %s75, %s76
    %p87 = scmp.eq.s32.totalorder %s15, 0
    %p88 = por %p86, %p87
    %p89 = scmp.ne.s32.totalorder %s75, %s76
    %p90 = scmp.eq.s32.totalorder %s16, 1
    %p91 = por %p89, %p90
    %p93 = scmp.ne.s32.totalorder %s76, %s92
    %p94 = scmp.eq.s32.totalorder %s16, 0
    %p95 = por %p93, %p94
    %s97 = sadd.s32 %s96, 1
    %p100 = scmp.eq.s32.totalorder %s10, 1
    %p101 = scmp.ne.s32.totalorder %s96, %s98
    %p102 = scmp.eq.s32.totalorder %s10, 0
    %p103 = por %p101, %p102
    %p104 = scmp.ne.s32.totalorder %s96, %s98
    %p105 = scmp.eq.s32.totalorder %s15, 1
    %p106 = por %p104, %p105
    %p107 = scmp.ne.s32.totalorder %s98, %s99
    %p108 = scmp.eq.s32.totalorder %s15, 0
    %p109 = por %p107, %p108
    %p110 = scmp.ne.s32.totalorder %s98, %s99
    %p111 = scmp.eq.s32.totalorder %s16, 1
    %p112 = por %p110, %p111
    %p114 = scmp.ne.s32.totalorder %s99, %s113
    %p115 = scmp.eq.s32.totalorder %s16, 0
    %p116 = por %p114, %p115
    %s117 = ssub.s32 %s10, %s17
    %p118 = scmp.eq.s32.totalorder %s117, 0
    %s120 = sadd.s32 %s119, 1
    %s121 = scalar_select %p118, %s119, %s120
    %p124 = pneg %p118
    %p125 = scmp.eq.s32.totalorder %s10, 1
    %p126 = por %p124, %p125
    %p127 = scmp.ne.s32.totalorder %s119, %s122
    %p128 = scmp.eq.s32.totalorder %s10, 0
    %p129 = por %p127, %p128
    %p130 = scmp.ne.s32.totalorder %s119, %s122
    %p131 = scmp.eq.s32.totalorder %s15, 1
    %p132 = por %p130, %p131
    %p133 = scmp.ne.s32.totalorder %s122, %s123
    %p134 = scmp.eq.s32.totalorder %s15, 0
    %p135 = por %p133, %p134
    %p136 = scmp.ne.s32.totalorder %s122, %s123
    %p137 = scmp.eq.s32.totalorder %s16, 1
    %p138 = por %p136, %p137
    %p140 = scmp.ne.s32.totalorder %s123, %s139
    %p141 = scmp.eq.s32.totalorder %s16, 0
    %p142 = por %p140, %p141
    %p143 = scmp.le.s32.totalorder 1, %s10
    %p144 = scmp.lt.s32.totalorder %s10, 3
    %p145 = pnand %p143, %p144
    %p146 = pneg %p145
    // Predicated region
    $region9: #{ssim_loss.1} parent=5 // pred_check
      _
    $region10: #{ssim_loss.1} parent=5 // pred_check_branch
      %148 = sbr.rel (%p145) target = $region12
    $region11: #{ssim_loss.1} parent=5 // pred_region
      %s149 = ssub.s32 %s10, 1
      // Predicated region
      $region13: #{ssim_loss.1} parent=11 // pred_check
        %p150 = pneg %p109
      $region14: #{ssim_loss.1} parent=11 // pred_check_branch
        %152 = sbr.rel (%p150) target = $region16
      $region15: #{ssim_loss.1} parent=11 // pred_region
        _
      $region16: #{ssim_loss.1} parent=11 // pred_fallthru
        _
    $region12: #{ssim_loss.1} parent=5 // pred_fallthru
      _
    %p153 = scmp.lt.s32.totalorder %s10, 2
    // Predicated region
    $region17: #{ssim_loss.1} parent=5 // pred_check
      %p154 = pneg %p153
    $region18: #{ssim_loss.1} parent=5 // pred_check_branch
      %156 = sbr.rel (%p154) target = $region20
    $region19: #{ssim_loss.1} parent=5 // pred_region
      // Predicated region
      $region21: #{ssim_loss.1} parent=19 // pred_check
        %p157 = pneg %p30
      $region22: #{ssim_loss.1} parent=19 // pred_check_branch
        %159 = sbr.rel (%p157) target = $region24
      $region23: #{ssim_loss.1} parent=19 // pred_region
        %s160 = smul.u32 4, %s10
        %p161 = scmp.lt.s32.totalorder %s160, 7
        %s162 = scalar_select %p161, %s160, 7
        %s163 = smul.addr %s162, 8
        %s164 = scalar_lea.vmem %s0, %s163
        %s165 = smul.u32 4, %s10
      $region24: #{ssim_loss.1} parent=19 // pred_fallthru
        _
      // Predicated region
      $region25: #{ssim_loss.1} parent=19 // pred_check
        %p166 = pneg %p56
      $region26: #{ssim_loss.1} parent=19 // pred_check_branch
        %168 = sbr.rel (%p166) target = $region28
      $region27: #{ssim_loss.1} parent=19 // pred_region
        %s169 = smul.u32 4, %s10
        %p170 = scmp.lt.s32.totalorder %s169, 7
        %s171 = scalar_select %p170, %s169, 7
        %s172 = smul.addr %s171, 8
        %s173 = scalar_lea.vmem %s1, %s172
        %s174 = smul.u32 4, %s10
      $region28: #{ssim_loss.1} parent=19 // pred_fallthru
        _
      // Predicated region
      $region29: #{ssim_loss.1} parent=19 // pred_check
        %p175 = pneg %p82
      $region30: #{ssim_loss.1} parent=19 // pred_check_branch
        %177 = sbr.rel (%p175) target = $region32
      $region31: #{ssim_loss.1} parent=19 // pred_region
        %s178 = smul.u32 4, %s10
        %p179 = scmp.lt.s32.totalorder %s178, 7
        %s180 = scalar_select %p179, %s178, 7
        %s181 = smul.addr %s180, 8
        %s182 = scalar_lea.vmem %s2, %s181
        %s183 = smul.u32 4, %s10
      $region32: #{ssim_loss.1} parent=19 // pred_fallthru
        _
    $region20: #{ssim_loss.1} parent=5 // pred_fallthru
      _
    %p184 = scmp.le.s32.totalorder 1, %s10
    %p185 = scmp.lt.s32.totalorder %s10, 3
    %p186 = pnand %p184, %p185
    %p187 = pneg %p186
    // Predicated region
    $region33: #{ssim_loss.1} parent=5 // pred_check
      _
    $region34: #{ssim_loss.1} parent=5 // pred_check_branch
      %189 = sbr.rel (%p186) target = $region36
    $region35: #{ssim_loss.1} parent=5 // pred_region
      %s190 = ssub.s32 %s10, 1
      %s191 = smul.u32 4, %s15
      %p192 = scmp.lt.s32.totalorder %s191, 7
      %s193 = scalar_select %p192, %s191, 7
      %s194 = smul.addr %s193, 8
      %s195 = scalar_lea.vmem %s0, %s194
      %p196 = pneg %p36
      %p197 = pneg %p33
      %s198 = smul.u32 4, %s15
      %p199 = scmp.lt.s32.totalorder %s198, 7
      %s200 = scalar_select %p199, %s198, 7
      %s201 = smul.addr %s200, 8
      %s202 = scalar_lea.vmem %s1, %s201
      %p203 = pneg %p62
      %p204 = pneg %p59
      %s205 = smul.u32 4, %s15
      %p206 = scmp.lt.s32.totalorder %s205, 7
      %s207 = scalar_select %p206, %s205, 7
      %s208 = smul.addr %s207, 8
      %s209 = scalar_lea.vmem %s2, %s208
      %p210 = pneg %p88
      %p211 = pneg %p85
      %p212 = pneg %p109
      %p213 = pneg %p106
      %p214 = pneg %p135
      %p215 = pneg %p132
      %p216 = scmp.lt.s32.totalorder %s15, 1
      %s217 = scalar_select %p216, %s15, 1
      %s218 = smul.addr %s217, 8
      %s219 = scalar_lea.vmem %s4, %s218
      %s220 = smul.u32 4, %s15
      %p221 = scmp.lt.s32.totalorder %s220, 7
      %s222 = scalar_select %p221, %s220, 7
      %s223 = smul.addr %s222, 8
      %s224 = scalar_lea.vmem %s0, %s223
      %s225 = smul.u32 4, %s15
      %s226 = smul.u32 4, %s15
      %p227 = scmp.lt.s32.totalorder %s226, 7
      %s228 = scalar_select %p227, %s226, 7
      %s229 = smul.addr %s228, 8
      %s230 = scalar_lea.vmem %s1, %s229
      %s231 = smul.u32 4, %s15
      %s232 = smul.u32 4, %s15
      %p233 = scmp.lt.s32.totalorder %s232, 7
      %s234 = scalar_select %p233, %s232, 7
      %s235 = smul.addr %s234, 8
      %s236 = scalar_lea.vmem %s2, %s235
      %s237 = smul.u32 4, %s15
      %p238 = scmp.lt.s32.totalorder %s15, 1
      %s239 = scalar_select %p238, %s15, 1
      %s240 = smul.addr %s239, 8
      %s241 = scalar_lea.vmem %s4, %s240
      %v242 = vld [vmem:[%s224] sm:$0xff]
      %v243 = vld [vmem:[%s224 + $0x8] sm:$0xff]
      %v244 = vld [vmem:[%s224 + $0x10] sm:$0xff]
      %v245 = vld [vmem:[%s224 + $0x18] sm:$0xff]
      %v246 = vld [vmem:[%s230] sm:$0xff]
      %v247 = vld [vmem:[%s230 + $0x8] sm:$0xff]
      %v248 = vld [vmem:[%s230 + $0x10] sm:$0xff]
      %v249 = vld [vmem:[%s230 + $0x18] sm:$0xff]
      %v250 = vmul.f32 %v242, %v242
      %v251 = vmul.f32 %v243, %v243
      %v252 = vmul.f32 %v244, %v244
      %v253 = vmul.f32 %v245, %v245
      %v254 = vmul.f32 %v246, %v246
      %v255 = vmul.f32 %v247, %v247
      %v256 = vmul.f32 %v248, %v248
      %v257 = vmul.f32 %v249, %v249
      %v258 = vmul.f32 %v242, %v246
      %v259 = vmul.f32 %v243, %v247
      %v260 = vmul.f32 %v244, %v248
      %v261 = vmul.f32 %v245, %v249
      %v262 = vmul.f32 %v242, 0.0003202979
      %v263 = vmul.f32 %v243, 0.0003202979
      %v264 = vmul.f32 %v244, 0.0003202979
      %v265 = vmul.f32 %v245, 0.0003202979
      %270 = vrot.lane.b32.xlu0 %v242, 119
      %v271 = vpop.permute.xlu0 %270
      %272 = vrot.lane.b32.xlu0 %v243, 119
      %v273 = vpop.permute.xlu0 %272
      %274 = vrot.lane.b32.xlu0 %v244, 119
      %v275 = vpop.permute.xlu0 %274
      %276 = vrot.lane.b32.xlu0 %v245, 119
      %v277 = vpop.permute.xlu0 %276
      %v282 = vadd.f32 %v242, %v271
      %v283 = vadd.f32 %v243, %v273
      %v284 = vadd.f32 %v244, %v275
      %v285 = vadd.f32 %v245, %v277
      %v286 = vmul.f32 %v282, 0.0029556495
      %v287 = vmul.f32 %v283, 0.0029556495
      %v288 = vmul.f32 %v284, 0.0029556495
      %v289 = vmul.f32 %v285, 0.0029556495
      %294 = vrot.lane.b32.xlu0 %v286, 127
      %v295 = vpop.permute.xlu0 %294
      %296 = vrot.lane.b32.xlu0 %v287, 127
      %v297 = vpop.permute.xlu0 %296
      %298 = vrot.lane.b32.xlu0 %v288, 127
      %v299 = vpop.permute.xlu0 %298
      %300 = vrot.lane.b32.xlu0 %v289, 127
      %v301 = vpop.permute.xlu0 %300
      %v306 = vadd.f32 %v262, %v295
      %v307 = vadd.f32 %v263, %v297
      %v308 = vadd.f32 %v264, %v299
      %v309 = vadd.f32 %v265, %v301
      %310 = vrot.lane.b32.xlu0 %v242, 121
      %v311 = vpop.permute.xlu0 %310
      %312 = vrot.lane.b32.xlu0 %v243, 121
      %v313 = vpop.permute.xlu0 %312
      %314 = vrot.lane.b32.xlu0 %v244, 121
      %v315 = vpop.permute.xlu0 %314
      %316 = vrot.lane.b32.xlu0 %v245, 121
      %v317 = vpop.permute.xlu0 %316
      %v322 = vadd.f32 %v242, %v311
      %v323 = vadd.f32 %v243, %v313
      %v324 = vadd.f32 %v244, %v315
      %v325 = vadd.f32 %v245, %v317
      %v326 = vmul.f32 %v322, 0.017487673
      %v327 = vmul.f32 %v323, 0.017487673
      %v328 = vmul.f32 %v324, 0.017487673
      %v329 = vmul.f32 %v325, 0.017487673
      %334 = vrot.lane.b32.xlu0 %v326, 126
      %v335 = vpop.permute.xlu0 %334
      %336 = vrot.lane.b32.xlu0 %v327, 126
      %v337 = vpop.permute.xlu0 %336
      %338 = vrot.lane.b32.xlu0 %v328, 126
      %v339 = vpop.permute.xlu0 %338
      %340 = vrot.lane.b32.xlu0 %v329, 126
      %v341 = vpop.permute.xlu0 %340
      %v346 = vadd.f32 %v306, %v335
      %v347 = vadd.f32 %v307, %v337
      %v348 = vadd.f32 %v308, %v339
      %v349 = vadd.f32 %v309, %v341
      %350 = vrot.lane.b32.xlu0 %v242, 123
      %v351 = vpop.permute.xlu0 %350
      %352 = vrot.lane.b32.xlu0 %v243, 123
      %v353 = vpop.permute.xlu0 %352
      %354 = vrot.lane.b32.xlu0 %v244, 123
      %v355 = vpop.permute.xlu0 %354
      %356 = vrot.lane.b32.xlu0 %v245, 123
      %v357 = vpop.permute.xlu0 %356
      %v362 = vadd.f32 %v242, %v351
      %v363 = vadd.f32 %v243, %v353
      %v364 = vadd.f32 %v244, %v355
      %v365 = vadd.f32 %v245, %v357
      %v366 = vmul.f32 %v362, 0.06634242
      %v367 = vmul.f32 %v363, 0.06634242
      %v368 = vmul.f32 %v364, 0.06634242
      %v369 = vmul.f32 %v365, 0.06634242
      %374 = vrot.lane.b32.xlu0 %v366, 125
      %v375 = vpop.permute.xlu0 %374
      %376 = vrot.lane.b32.xlu0 %v367, 125
      %v377 = vpop.permute.xlu0 %376
      %378 = vrot.lane.b32.xlu0 %v368, 125
      %v379 = vpop.permute.xlu0 %378
      %380 = vrot.lane.b32.xlu0 %v369, 125
      %v381 = vpop.permute.xlu0 %380
      %v386 = vadd.f32 %v346, %v375
      %v387 = vadd.f32 %v347, %v377
      %v388 = vadd.f32 %v348, %v379
      %v389 = vadd.f32 %v349, %v381
      %390 = vrot.lane.b32.xlu0 %v242, 125
      %v391 = vpop.permute.xlu0 %390
      %392 = vrot.lane.b32.xlu0 %v243, 125
      %v393 = vpop.permute.xlu0 %392
      %394 = vrot.lane.b32.xlu0 %v244, 125
      %v395 = vpop.permute.xlu0 %394
      %396 = vrot.lane.b32.xlu0 %v245, 125
      %v397 = vpop.permute.xlu0 %396
      %v402 = vadd.f32 %v242, %v391
      %v403 = vadd.f32 %v243, %v393
      %v404 = vadd.f32 %v244, %v395
      %v405 = vadd.f32 %v245, %v397
      %v406 = vmul.f32 %v402, 0.161373
      %v407 = vmul.f32 %v403, 0.161373
      %v408 = vmul.f32 %v404, 0.161373
      %v409 = vmul.f32 %v405, 0.161373
      %414 = vrot.lane.b32.xlu0 %v406, 124
      %v415 = vpop.permute.xlu0 %414
      %416 = vrot.lane.b32.xlu0 %v407, 124
      %v417 = vpop.permute.xlu0 %416
      %418 = vrot.lane.b32.xlu0 %v408, 124
      %v419 = vpop.permute.xlu0 %418
      %420 = vrot.lane.b32.xlu0 %v409, 124
      %v421 = vpop.permute.xlu0 %420
      %v426 = vadd.f32 %v386, %v415
      %v427 = vadd.f32 %v387, %v417
      %v428 = vadd.f32 %v388, %v419
      %v429 = vadd.f32 %v389, %v421
      %430 = vrot.lane.b32.xlu0 %v242, 127
      %v431 = vpop.permute.xlu0 %430
      %432 = vrot.lane.b32.xlu0 %v243, 127
      %v433 = vpop.permute.xlu0 %432
      %434 = vrot.lane.b32.xlu0 %v244, 127
      %v435 = vpop.permute.xlu0 %434
      %436 = vrot.lane.b32.xlu0 %v245, 127
      %v437 = vpop.permute.xlu0 %436
      %v442 = vadd.f32 %v242, %v431
      %v443 = vadd.f32 %v243, %v433
      %v444 = vadd.f32 %v244, %v435
      %v445 = vadd.f32 %v245, %v437
      %v446 = vmul.f32 %v442, 0.25168112
      %v447 = vmul.f32 %v443, 0.25168112
      %v448 = vmul.f32 %v444, 0.25168112
      %v449 = vmul.f32 %v445, 0.25168112
      %454 = vrot.lane.b32.xlu0 %v446, 123
      %v455 = vpop.permute.xlu0 %454
      %456 = vrot.lane.b32.xlu0 %v447, 123
      %v457 = vpop.permute.xlu0 %456
      %458 = vrot.lane.b32.xlu0 %v448, 123
      %v459 = vpop.permute.xlu0 %458
      %460 = vrot.lane.b32.xlu0 %v449, 123
      %v461 = vpop.permute.xlu0 %460
      %v466 = vadd.f32 %v426, %v455
      %v467 = vadd.f32 %v427, %v457
      %v468 = vadd.f32 %v428, %v459
      %v469 = vadd.f32 %v429, %v461
      %v470 = vmul.f32 %v466, 0.0003202979
      %v471 = vmul.f32 %v467, 0.0003202979
      %v472 = vmul.f32 %v468, 0.0003202979
      %vm476 = vcmask 1046528
      %v477 = vrot.slane %v467, 1
      %v478 = vrot.slane %v468, 1
      %v479 = vsel %vm476, %v477, %v478
      %v480 = vrot.slane %v469, 1
      %v481 = vsel %vm476, %v478, %v480
      %v485 = vadd.f32 %v466, %v479
      %v486 = vadd.f32 %v467, %v481
      %v487 = vadd.f32 %v468, %v480
      %v488 = vmul.f32 %v485, 0.0029556495
      %v489 = vmul.f32 %v486, 0.0029556495
      %v490 = vmul.f32 %v487, 0.0029556495
      %v494 = vrot.slane %v488, 1
      %v495 = vrot.slane %v489, 1
      %v496 = vsel %vm476, %v494, %v495
      %v497 = vrot.slane %v490, 1
      %v498 = vsel %vm476, %v495, %v497
      %v502 = vadd.f32 %v470, %v496
      %v503 = vadd.f32 %v471, %v498
      %v504 = vadd.f32 %v472, %v497
      %vm505 = vcmask 1040384
      %v506 = vrot.slane %v467, 7
      %v507 = vrot.slane %v468, 7
      %v508 = vsel %vm505, %v506, %v507
      %v509 = vrot.slane %v469, 7
      %v510 = vsel %vm505, %v507, %v509
      %v514 = vadd.f32 %v466, %v506
      %v515 = vadd.f32 %v467, %v508
      %v516 = vadd.f32 %v468, %v510
      %v517 = vmul.f32 %v514, 0.017487673
      %v518 = vmul.f32 %v515, 0.017487673
      %v519 = vmul.f32 %v516, 0.017487673
      %vm523 = vcmask 1045504
      %v524 = vrot.slane %v517, 2
      %v525 = vrot.slane %v518, 2
      %v526 = vsel %vm523, %v524, %v525
      %v527 = vrot.slane %v519, 2
      %v528 = vsel %vm523, %v525, %v527
      %v532 = vadd.f32 %v502, %v526
      %v533 = vadd.f32 %v503, %v528
      %v534 = vadd.f32 %v504, %v527
      %vm535 = vcmask 1042432
      %v536 = vrot.slane %v467, 5
      %v537 = vrot.slane %v468, 5
      %v538 = vsel %vm535, %v536, %v537
      %v539 = vrot.slane %v469, 5
      %v540 = vsel %vm535, %v537, %v539
      %v545 = vadd.f32 %v466, %v536
      %v546 = vadd.f32 %v467, %v538
      %v547 = vadd.f32 %v468, %v540
      %v548 = vadd.f32 %v469, %v539
      %v549 = vmul.f32 %v545, 0.06634242
      %v550 = vmul.f32 %v546, 0.06634242
      %v551 = vmul.f32 %v547, 0.06634242
      %v552 = vmul.f32 %v548, 0.06634242
      %vm557 = vcmask 1044480
      %v558 = vrot.slane %v549, 3
      %v559 = vrot.slane %v550, 3
      %v560 = vsel %vm557, %v558, %v559
      %v561 = vrot.slane %v551, 3
      %v562 = vsel %vm557, %v559, %v561
      %v563 = vrot.slane %v552, 3
      %v564 = vsel %vm557, %v561, %v563
      %v568 = vadd.f32 %v532, %v560
      %v569 = vadd.f32 %v533, %v562
      %v570 = vadd.f32 %v534, %v564
      %v572 = vrot.slane %v466, 3
      %v573 = vrot.slane %v467, 3
      %v574 = vsel %vm557, %v572, %v573
      %v575 = vrot.slane %v468, 3
      %v576 = vsel %vm557, %v573, %v575
      %v577 = vrot.slane %v469, 3
      %v578 = vsel %vm557, %v575, %v577
      %v583 = vadd.f32 %v466, %v574
      %v584 = vadd.f32 %v467, %v576
      %v585 = vadd.f32 %v468, %v578
      %v586 = vadd.f32 %v469, %v577
      %v587 = vmul.f32 %v583, 0.161373
      %v588 = vmul.f32 %v584, 0.161373
      %v589 = vmul.f32 %v585, 0.161373
      %v590 = vmul.f32 %v586, 0.161373
      %vm595 = vcmask 1043456
      %v596 = vrot.slane %v587, 4
      %v597 = vrot.slane %v588, 4
      %v598 = vsel %vm595, %v596, %v597
      %v599 = vrot.slane %v589, 4
      %v600 = vsel %vm595, %v597, %v599
      %v601 = vrot.slane %v590, 4
      %v602 = vsel %vm595, %v599, %v601
      %v606 = vadd.f32 %v568, %v598
      %v607 = vadd.f32 %v569, %v600
      %v608 = vadd.f32 %v570, %v602
      %v609 = vrot.slane %v466, 1
      %v610 = vsel %vm476, %v609, %v477
      %v612 = vadd.f32 %v466, %v610
      %v613 = vadd.f32 %v467, %v479
      %v614 = vadd.f32 %v468, %v481
      %v615 = vadd.f32 %v469, %v480
      %v616 = vmul.f32 %v612, 0.25168112
      %v617 = vmul.f32 %v613, 0.25168112
      %v618 = vmul.f32 %v614, 0.25168112
      %v619 = vmul.f32 %v615, 0.25168112
      %v624 = vrot.slane %v616, 5
      %v625 = vrot.slane %v617, 5
      %v626 = vsel %vm535, %v624, %v625
      %v627 = vrot.slane %v618, 5
      %v628 = vsel %vm535, %v625, %v627
      %v629 = vrot.slane %v619, 5
      %v630 = vsel %vm535, %v627, %v629
      %v634 = vadd.f32 %v606, %v626
      %v635 = vadd.f32 %v607, %v628
      %v636 = vadd.f32 %v608, %v630
      %v637 = vmul.f32 %v246, 0.0003202979
      %v638 = vmul.f32 %v247, 0.0003202979
      %v639 = vmul.f32 %v248, 0.0003202979
      %v640 = vmul.f32 %v249, 0.0003202979
      %645 = vrot.lane.b32.xlu0 %v246, 119
      %v646 = vpop.permute.xlu0 %645
      %647 = vrot.lane.b32.xlu0 %v247, 119
      %v648 = vpop.permute.xlu0 %647
      %649 = vrot.lane.b32.xlu0 %v248, 119
      %v650 = vpop.permute.xlu0 %649
      %651 = vrot.lane.b32.xlu0 %v249, 119
      %v652 = vpop.permute.xlu0 %651
      %v657 = vadd.f32 %v246, %v646
      %v658 = vadd.f32 %v247, %v648
      %v659 = vadd.f32 %v248, %v650
      %v660 = vadd.f32 %v249, %v652
      %v661 = vmul.f32 %v657, 0.0029556495
      %v662 = vmul.f32 %v658, 0.0029556495
      %v663 = vmul.f32 %v659, 0.0029556495
      %v664 = vmul.f32 %v660, 0.0029556495
      %669 = vrot.lane.b32.xlu0 %v661, 127
      %v670 = vpop.permute.xlu0 %669
      %671 = vrot.lane.b32.xlu0 %v662, 127
      %v672 = vpop.permute.xlu0 %671
      %673 = vrot.lane.b32.xlu0 %v663, 127
      %v674 = vpop.permute.xlu0 %673
      %675 = vrot.lane.b32.xlu0 %v664, 127
      %v676 = vpop.permute.xlu0 %675
      %v681 = vadd.f32 %v637, %v670
      %v682 = vadd.f32 %v638, %v672
      %v683 = vadd.f32 %v639, %v674
      %v684 = vadd.f32 %v640, %v676
      %685 = vrot.lane.b32.xlu0 %v246, 121
      %v686 = vpop.permute.xlu0 %685
      %687 = vrot.lane.b32.xlu0 %v247, 121
      %v688 = vpop.permute.xlu0 %687
      %689 = vrot.lane.b32.xlu0 %v248, 121
      %v690 = vpop.permute.xlu0 %689
      %691 = vrot.lane.b32.xlu0 %v249, 121
      %v692 = vpop.permute.xlu0 %691
      %v697 = vadd.f32 %v246, %v686
      %v698 = vadd.f32 %v247, %v688
      %v699 = vadd.f32 %v248, %v690
      %v700 = vadd.f32 %v249, %v692
      %v701 = vmul.f32 %v697, 0.017487673
      %v702 = vmul.f32 %v698, 0.017487673
      %v703 = vmul.f32 %v699, 0.017487673
      %v704 = vmul.f32 %v700, 0.017487673
      %709 = vrot.lane.b32.xlu0 %v701, 126
      %v710 = vpop.permute.xlu0 %709
      %711 = vrot.lane.b32.xlu0 %v702, 126
      %v712 = vpop.permute.xlu0 %711
      %713 = vrot.lane.b32.xlu0 %v703, 126
      %v714 = vpop.permute.xlu0 %713
      %715 = vrot.lane.b32.xlu0 %v704, 126
      %v716 = vpop.permute.xlu0 %715
      %v721 = vadd.f32 %v681, %v710
      %v722 = vadd.f32 %v682, %v712
      %v723 = vadd.f32 %v683, %v714
      %v724 = vadd.f32 %v684, %v716
      %725 = vrot.lane.b32.xlu0 %v246, 123
      %v726 = vpop.permute.xlu0 %725
      %727 = vrot.lane.b32.xlu0 %v247, 123
      %v728 = vpop.permute.xlu0 %727
      %729 = vrot.lane.b32.xlu0 %v248, 123
      %v730 = vpop.permute.xlu0 %729
      %731 = vrot.lane.b32.xlu0 %v249, 123
      %v732 = vpop.permute.xlu0 %731
      %v737 = vadd.f32 %v246, %v726
      %v738 = vadd.f32 %v247, %v728
      %v739 = vadd.f32 %v248, %v730
      %v740 = vadd.f32 %v249, %v732
      %v741 = vmul.f32 %v737, 0.06634242
      %v742 = vmul.f32 %v738, 0.06634242
      %v743 = vmul.f32 %v739, 0.06634242
      %v744 = vmul.f32 %v740, 0.06634242
      %749 = vrot.lane.b32.xlu0 %v741, 125
      %v750 = vpop.permute.xlu0 %749
      %751 = vrot.lane.b32.xlu0 %v742, 125
      %v752 = vpop.permute.xlu0 %751
      %753 = vrot.lane.b32.xlu0 %v743, 125
      %v754 = vpop.permute.xlu0 %753
      %755 = vrot.lane.b32.xlu0 %v744, 125
      %v756 = vpop.permute.xlu0 %755
      %v761 = vadd.f32 %v721, %v750
      %v762 = vadd.f32 %v722, %v752
      %v763 = vadd.f32 %v723, %v754
      %v764 = vadd.f32 %v724, %v756
      %765 = vrot.lane.b32.xlu0 %v246, 125
      %v766 = vpop.permute.xlu0 %765
      %767 = vrot.lane.b32.xlu0 %v247, 125
      %v768 = vpop.permute.xlu0 %767
      %769 = vrot.lane.b32.xlu0 %v248, 125
      %v770 = vpop.permute.xlu0 %769
      %771 = vrot.lane.b32.xlu0 %v249, 125
      %v772 = vpop.permute.xlu0 %771
      %v777 = vadd.f32 %v246, %v766
      %v778 = vadd.f32 %v247, %v768
      %v779 = vadd.f32 %v248, %v770
      %v780 = vadd.f32 %v249, %v772
      %v781 = vmul.f32 %v777, 0.161373
      %v782 = vmul.f32 %v778, 0.161373
      %v783 = vmul.f32 %v779, 0.161373
      %v784 = vmul.f32 %v780, 0.161373
      %789 = vrot.lane.b32.xlu0 %v781, 124
      %v790 = vpop.permute.xlu0 %789
      %791 = vrot.lane.b32.xlu0 %v782, 124
      %v792 = vpop.permute.xlu0 %791
      %793 = vrot.lane.b32.xlu0 %v783, 124
      %v794 = vpop.permute.xlu0 %793
      %795 = vrot.lane.b32.xlu0 %v784, 124
      %v796 = vpop.permute.xlu0 %795
      %v801 = vadd.f32 %v761, %v790
      %v802 = vadd.f32 %v762, %v792
      %v803 = vadd.f32 %v763, %v794
      %v804 = vadd.f32 %v764, %v796
      %805 = vrot.lane.b32.xlu0 %v246, 127
      %v806 = vpop.permute.xlu0 %805
      %807 = vrot.lane.b32.xlu0 %v247, 127
      %v808 = vpop.permute.xlu0 %807
      %809 = vrot.lane.b32.xlu0 %v248, 127
      %v810 = vpop.permute.xlu0 %809
      %811 = vrot.lane.b32.xlu0 %v249, 127
      %v812 = vpop.permute.xlu0 %811
      %v817 = vadd.f32 %v246, %v806
      %v818 = vadd.f32 %v247, %v808
      %v819 = vadd.f32 %v248, %v810
      %v820 = vadd.f32 %v249, %v812
      %v821 = vmul.f32 %v817, 0.25168112
      %v822 = vmul.f32 %v818, 0.25168112
      %v823 = vmul.f32 %v819, 0.25168112
      %v824 = vmul.f32 %v820, 0.25168112
      %829 = vrot.lane.b32.xlu0 %v821, 123
      %v830 = vpop.permute.xlu0 %829
      %831 = vrot.lane.b32.xlu0 %v822, 123
      %v832 = vpop.permute.xlu0 %831
      %833 = vrot.lane.b32.xlu0 %v823, 123
      %v834 = vpop.permute.xlu0 %833
      %835 = vrot.lane.b32.xlu0 %v824, 123
      %v836 = vpop.permute.xlu0 %835
      %v841 = vadd.f32 %v801, %v830
      %v842 = vadd.f32 %v802, %v832
      %v843 = vadd.f32 %v803, %v834
      %v844 = vadd.f32 %v804, %v836
      %v845 = vmul.f32 %v841, 0.0003202979
      %v846 = vmul.f32 %v842, 0.0003202979
      %v847 = vmul.f32 %v843, 0.0003202979
      %v851 = vrot.slane %v842, 1
      %v852 = vrot.slane %v843, 1
      %v853 = vsel %vm476, %v851, %v852
      %v854 = vrot.slane %v844, 1
      %v855 = vsel %vm476, %v852, %v854
      %v859 = vadd.f32 %v841, %v853
      %v860 = vadd.f32 %v842, %v855
      %v861 = vadd.f32 %v843, %v854
      %v862 = vmul.f32 %v859, 0.0029556495
      %v863 = vmul.f32 %v860, 0.0029556495
      %v864 = vmul.f32 %v861, 0.0029556495
      %v868 = vrot.slane %v862, 1
      %v869 = vrot.slane %v863, 1
      %v870 = vsel %vm476, %v868, %v869
      %v871 = vrot.slane %v864, 1
      %v872 = vsel %vm476, %v869, %v871
      %v876 = vadd.f32 %v845, %v870
      %v877 = vadd.f32 %v846, %v872
      %v878 = vadd.f32 %v847, %v871
      %v879 = vrot.slane %v842, 7
      %v880 = vrot.slane %v843, 7
      %v881 = vsel %vm505, %v879, %v880
      %v882 = vrot.slane %v844, 7
      %v883 = vsel %vm505, %v880, %v882
      %v887 = vadd.f32 %v841, %v879
      %v888 = vadd.f32 %v842, %v881
      %v889 = vadd.f32 %v843, %v883
      %v890 = vmul.f32 %v887, 0.017487673
      %v891 = vmul.f32 %v888, 0.017487673
      %v892 = vmul.f32 %v889, 0.017487673
      %v896 = vrot.slane %v890, 2
      %v897 = vrot.slane %v891, 2
      %v898 = vsel %vm523, %v896, %v897
      %v899 = vrot.slane %v892, 2
      %v900 = vsel %vm523, %v897, %v899
      %v904 = vadd.f32 %v876, %v898
      %v905 = vadd.f32 %v877, %v900
      %v906 = vadd.f32 %v878, %v899
      %v907 = vrot.slane %v842, 5
      %v908 = vrot.slane %v843, 5
      %v909 = vsel %vm535, %v907, %v908
      %v910 = vrot.slane %v844, 5
      %v911 = vsel %vm535, %v908, %v910
      %v916 = vadd.f32 %v841, %v907
      %v917 = vadd.f32 %v842, %v909
      %v918 = vadd.f32 %v843, %v911
      %v919 = vadd.f32 %v844, %v910
      %v920 = vmul.f32 %v916, 0.06634242
      %v921 = vmul.f32 %v917, 0.06634242
      %v922 = vmul.f32 %v918, 0.06634242
      %v923 = vmul.f32 %v919, 0.06634242
      %v928 = vrot.slane %v920, 3
      %v929 = vrot.slane %v921, 3
      %v930 = vsel %vm557, %v928, %v929
      %v931 = vrot.slane %v922, 3
      %v932 = vsel %vm557, %v929, %v931
      %v933 = vrot.slane %v923, 3
      %v934 = vsel %vm557, %v931, %v933
      %v938 = vadd.f32 %v904, %v930
      %v939 = vadd.f32 %v905, %v932
      %v940 = vadd.f32 %v906, %v934
      %v942 = vrot.slane %v841, 3
      %v943 = vrot.slane %v842, 3
      %v944 = vsel %vm557, %v942, %v943
      %v945 = vrot.slane %v843, 3
      %v946 = vsel %vm557, %v943, %v945
      %v947 = vrot.slane %v844, 3
      %v948 = vsel %vm557, %v945, %v947
      %v953 = vadd.f32 %v841, %v944
      %v954 = vadd.f32 %v842, %v946
      %v955 = vadd.f32 %v843, %v948
      %v956 = vadd.f32 %v844, %v947
      %v957 = vmul.f32 %v953, 0.161373
      %v958 = vmul.f32 %v954, 0.161373
      %v959 = vmul.f32 %v955, 0.161373
      %v960 = vmul.f32 %v956, 0.161373
      %v965 = vrot.slane %v957, 4
      %v966 = vrot.slane %v958, 4
      %v967 = vsel %vm595, %v965, %v966
      %v968 = vrot.slane %v959, 4
      %v969 = vsel %vm595, %v966, %v968
      %v970 = vrot.slane %v960, 4
      %v971 = vsel %vm595, %v968, %v970
      %v975 = vadd.f32 %v938, %v967
      %v976 = vadd.f32 %v939, %v969
      %v977 = vadd.f32 %v940, %v971
      %v978 = vrot.slane %v841, 1
      %v979 = vsel %vm476, %v978, %v851
      %v981 = vadd.f32 %v841, %v979
      %v982 = vadd.f32 %v842, %v853
      %v983 = vadd.f32 %v843, %v855
      %v984 = vadd.f32 %v844, %v854
      %v985 = vmul.f32 %v981, 0.25168112
      %v986 = vmul.f32 %v982, 0.25168112
      %v987 = vmul.f32 %v983, 0.25168112
      %v988 = vmul.f32 %v984, 0.25168112
      %v993 = vrot.slane %v985, 5
      %v994 = vrot.slane %v986, 5
      %v995 = vsel %vm535, %v993, %v994
      %v996 = vrot.slane %v987, 5
      %v997 = vsel %vm535, %v994, %v996
      %v998 = vrot.slane %v988, 5
      %v999 = vsel %vm535, %v996, %v998
      %v1003 = vadd.f32 %v975, %v995
      %v1004 = vadd.f32 %v976, %v997
      %v1005 = vadd.f32 %v977, %v999
      %v1006 = vmul.f32 %v250, 0.0003202979
      %v1007 = vmul.f32 %v251, 0.0003202979
      %v1008 = vmul.f32 %v252, 0.0003202979
      %v1009 = vmul.f32 %v253, 0.0003202979
      %1014 = vrot.lane.b32.xlu0 %v250, 119
      %v1015 = vpop.permute.xlu0 %1014
      %1016 = vrot.lane.b32.xlu0 %v251, 119
      %v1017 = vpop.permute.xlu0 %1016
      %1018 = vrot.lane.b32.xlu0 %v252, 119
      %v1019 = vpop.permute.xlu0 %1018
      %1020 = vrot.lane.b32.xlu0 %v253, 119
      %v1021 = vpop.permute.xlu0 %1020
      %v1026 = vadd.f32 %v250, %v1015
      %v1027 = vadd.f32 %v251, %v1017
      %v1028 = vadd.f32 %v252, %v1019
      %v1029 = vadd.f32 %v253, %v1021
      %v1030 = vmul.f32 %v1026, 0.0029556495
      %v1031 = vmul.f32 %v1027, 0.0029556495
      %v1032 = vmul.f32 %v1028, 0.0029556495
      %v1033 = vmul.f32 %v1029, 0.0029556495
      %1038 = vrot.lane.b32.xlu0 %v1030, 127
      %v1039 = vpop.permute.xlu0 %1038
      %1040 = vrot.lane.b32.xlu0 %v1031, 127
      %v1041 = vpop.permute.xlu0 %1040
      %1042 = vrot.lane.b32.xlu0 %v1032, 127
      %v1043 = vpop.permute.xlu0 %1042
      %1044 = vrot.lane.b32.xlu0 %v1033, 127
      %v1045 = vpop.permute.xlu0 %1044
      %v1050 = vadd.f32 %v1006, %v1039
      %v1051 = vadd.f32 %v1007, %v1041
      %v1052 = vadd.f32 %v1008, %v1043
      %v1053 = vadd.f32 %v1009, %v1045
      %1054 = vrot.lane.b32.xlu0 %v250, 121
      %v1055 = vpop.permute.xlu0 %1054
      %1056 = vrot.lane.b32.xlu0 %v251, 121
      %v1057 = vpop.permute.xlu0 %1056
      %1058 = vrot.lane.b32.xlu0 %v252, 121
      %v1059 = vpop.permute.xlu0 %1058
      %1060 = vrot.lane.b32.xlu0 %v253, 121
      %v1061 = vpop.permute.xlu0 %1060
      %v1066 = vadd.f32 %v250, %v1055
      %v1067 = vadd.f32 %v251, %v1057
      %v1068 = vadd.f32 %v252, %v1059
      %v1069 = vadd.f32 %v253, %v1061
      %v1070 = vmul.f32 %v1066, 0.017487673
      %v1071 = vmul.f32 %v1067, 0.017487673
      %v1072 = vmul.f32 %v1068, 0.017487673
      %v1073 = vmul.f32 %v1069, 0.017487673
      %1078 = vrot.lane.b32.xlu0 %v1070, 126
      %v1079 = vpop.permute.xlu0 %1078
      %1080 = vrot.lane.b32.xlu0 %v1071, 126
      %v1081 = vpop.permute.xlu0 %1080
      %1082 = vrot.lane.b32.xlu0 %v1072, 126
      %v1083 = vpop.permute.xlu0 %1082
      %1084 = vrot.lane.b32.xlu0 %v1073, 126
      %v1085 = vpop.permute.xlu0 %1084
      %v1090 = vadd.f32 %v1050, %v1079
      %v1091 = vadd.f32 %v1051, %v1081
      %v1092 = vadd.f32 %v1052, %v1083
      %v1093 = vadd.f32 %v1053, %v1085
      %1094 = vrot.lane.b32.xlu0 %v250, 123
      %v1095 = vpop.permute.xlu0 %1094
      %1096 = vrot.lane.b32.xlu0 %v251, 123
      %v1097 = vpop.permute.xlu0 %1096
      %1098 = vrot.lane.b32.xlu0 %v252, 123
      %v1099 = vpop.permute.xlu0 %1098
      %1100 = vrot.lane.b32.xlu0 %v253, 123
      %v1101 = vpop.permute.xlu0 %1100
      %v1106 = vadd.f32 %v250, %v1095
      %v1107 = vadd.f32 %v251, %v1097
      %v1108 = vadd.f32 %v252, %v1099
      %v1109 = vadd.f32 %v253, %v1101
      %v1110 = vmul.f32 %v1106, 0.06634242
      %v1111 = vmul.f32 %v1107, 0.06634242
      %v1112 = vmul.f32 %v1108, 0.06634242
      %v1113 = vmul.f32 %v1109, 0.06634242
      %1118 = vrot.lane.b32.xlu0 %v1110, 125
      %v1119 = vpop.permute.xlu0 %1118
      %1120 = vrot.lane.b32.xlu0 %v1111, 125
      %v1121 = vpop.permute.xlu0 %1120
      %1122 = vrot.lane.b32.xlu0 %v1112, 125
      %v1123 = vpop.permute.xlu0 %1122
      %1124 = vrot.lane.b32.xlu0 %v1113, 125
      %v1125 = vpop.permute.xlu0 %1124
      %v1130 = vadd.f32 %v1090, %v1119
      %v1131 = vadd.f32 %v1091, %v1121
      %v1132 = vadd.f32 %v1092, %v1123
      %v1133 = vadd.f32 %v1093, %v1125
      %1134 = vrot.lane.b32.xlu0 %v250, 125
      %v1135 = vpop.permute.xlu0 %1134
      %1136 = vrot.lane.b32.xlu0 %v251, 125
      %v1137 = vpop.permute.xlu0 %1136
      %1138 = vrot.lane.b32.xlu0 %v252, 125
      %v1139 = vpop.permute.xlu0 %1138
      %1140 = vrot.lane.b32.xlu0 %v253, 125
      %v1141 = vpop.permute.xlu0 %1140
      %v1146 = vadd.f32 %v250, %v1135
      %v1147 = vadd.f32 %v251, %v1137
      %v1148 = vadd.f32 %v252, %v1139
      %v1149 = vadd.f32 %v253, %v1141
      %v1150 = vmul.f32 %v1146, 0.161373
      %v1151 = vmul.f32 %v1147, 0.161373
      %v1152 = vmul.f32 %v1148, 0.161373
      %v1153 = vmul.f32 %v1149, 0.161373
      %1158 = vrot.lane.b32.xlu0 %v1150, 124
      %v1159 = vpop.permute.xlu0 %1158
      %1160 = vrot.lane.b32.xlu0 %v1151, 124
      %v1161 = vpop.permute.xlu0 %1160
      %1162 = vrot.lane.b32.xlu0 %v1152, 124
      %v1163 = vpop.permute.xlu0 %1162
      %1164 = vrot.lane.b32.xlu0 %v1153, 124
      %v1165 = vpop.permute.xlu0 %1164
      %v1170 = vadd.f32 %v1130, %v1159
      %v1171 = vadd.f32 %v1131, %v1161
      %v1172 = vadd.f32 %v1132, %v1163
      %v1173 = vadd.f32 %v1133, %v1165
      %1174 = vrot.lane.b32.xlu0 %v250, 127
      %v1175 = vpop.permute.xlu0 %1174
      %1176 = vrot.lane.b32.xlu0 %v251, 127
      %v1177 = vpop.permute.xlu0 %1176
      %1178 = vrot.lane.b32.xlu0 %v252, 127
      %v1179 = vpop.permute.xlu0 %1178
      %1180 = vrot.lane.b32.xlu0 %v253, 127
      %v1181 = vpop.permute.xlu0 %1180
      %v1186 = vadd.f32 %v250, %v1175
      %v1187 = vadd.f32 %v251, %v1177
      %v1188 = vadd.f32 %v252, %v1179
      %v1189 = vadd.f32 %v253, %v1181
      %v1190 = vmul.f32 %v1186, 0.25168112
      %v1191 = vmul.f32 %v1187, 0.25168112
      %v1192 = vmul.f32 %v1188, 0.25168112
      %v1193 = vmul.f32 %v1189, 0.25168112
      %1198 = vrot.lane.b32.xlu0 %v1190, 123
      %v1199 = vpop.permute.xlu0 %1198
      %1200 = vrot.lane.b32.xlu0 %v1191, 123
      %v1201 = vpop.permute.xlu0 %1200
      %1202 = vrot.lane.b32.xlu0 %v1192, 123
      %v1203 = vpop.permute.xlu0 %1202
      %1204 = vrot.lane.b32.xlu0 %v1193, 123
      %v1205 = vpop.permute.xlu0 %1204
      %v1210 = vadd.f32 %v1170, %v1199
      %v1211 = vadd.f32 %v1171, %v1201
      %v1212 = vadd.f32 %v1172, %v1203
      %v1213 = vadd.f32 %v1173, %v1205
      %v1214 = vmul.f32 %v1210, 0.0003202979
      %v1215 = vmul.f32 %v1211, 0.0003202979
      %v1216 = vmul.f32 %v1212, 0.0003202979
      %v1220 = vrot.slane %v1211, 1
      %v1221 = vrot.slane %v1212, 1
      %v1222 = vsel %vm476, %v1220, %v1221
      %v1223 = vrot.slane %v1213, 1
      %v1224 = vsel %vm476, %v1221, %v1223
      %v1228 = vadd.f32 %v1210, %v1222
      %v1229 = vadd.f32 %v1211, %v1224
      %v1230 = vadd.f32 %v1212, %v1223
      %v1231 = vmul.f32 %v1228, 0.0029556495
      %v1232 = vmul.f32 %v1229, 0.0029556495
      %v1233 = vmul.f32 %v1230, 0.0029556495
      %v1237 = vrot.slane %v1231, 1
      %v1238 = vrot.slane %v1232, 1
      %v1239 = vsel %vm476, %v1237, %v1238
      %v1240 = vrot.slane %v1233, 1
      %v1241 = vsel %vm476, %v1238, %v1240
      %v1245 = vadd.f32 %v1214, %v1239
      %v1246 = vadd.f32 %v1215, %v1241
      %v1247 = vadd.f32 %v1216, %v1240
      %v1248 = vrot.slane %v1211, 7
      %v1249 = vrot.slane %v1212, 7
      %v1250 = vsel %vm505, %v1248, %v1249
      %v1251 = vrot.slane %v1213, 7
      %v1252 = vsel %vm505, %v1249, %v1251
      %v1256 = vadd.f32 %v1210, %v1248
      %v1257 = vadd.f32 %v1211, %v1250
      %v1258 = vadd.f32 %v1212, %v1252
      %v1259 = vmul.f32 %v1256, 0.017487673
      %v1260 = vmul.f32 %v1257, 0.017487673
      %v1261 = vmul.f32 %v1258, 0.017487673
      %v1265 = vrot.slane %v1259, 2
      %v1266 = vrot.slane %v1260, 2
      %v1267 = vsel %vm523, %v1265, %v1266
      %v1268 = vrot.slane %v1261, 2
      %v1269 = vsel %vm523, %v1266, %v1268
      %v1273 = vadd.f32 %v1245, %v1267
      %v1274 = vadd.f32 %v1246, %v1269
      %v1275 = vadd.f32 %v1247, %v1268
      %v1276 = vrot.slane %v1211, 5
      %v1277 = vrot.slane %v1212, 5
      %v1278 = vsel %vm535, %v1276, %v1277
      %v1279 = vrot.slane %v1213, 5
      %v1280 = vsel %vm535, %v1277, %v1279
      %v1285 = vadd.f32 %v1210, %v1276
      %v1286 = vadd.f32 %v1211, %v1278
      %v1287 = vadd.f32 %v1212, %v1280
      %v1288 = vadd.f32 %v1213, %v1279
      %v1289 = vmul.f32 %v1285, 0.06634242
      %v1290 = vmul.f32 %v1286, 0.06634242
      %v1291 = vmul.f32 %v1287, 0.06634242
      %v1292 = vmul.f32 %v1288, 0.06634242
      %v1297 = vrot.slane %v1289, 3
      %v1298 = vrot.slane %v1290, 3
      %v1299 = vsel %vm557, %v1297, %v1298
      %v1300 = vrot.slane %v1291, 3
      %v1301 = vsel %vm557, %v1298, %v1300
      %v1302 = vrot.slane %v1292, 3
      %v1303 = vsel %vm557, %v1300, %v1302
      %v1307 = vadd.f32 %v1273, %v1299
      %v1308 = vadd.f32 %v1274, %v1301
      %v1309 = vadd.f32 %v1275, %v1303
      %v1311 = vrot.slane %v1210, 3
      %v1312 = vrot.slane %v1211, 3
      %v1313 = vsel %vm557, %v1311, %v1312
      %v1314 = vrot.slane %v1212, 3
      %v1315 = vsel %vm557, %v1312, %v1314
      %v1316 = vrot.slane %v1213, 3
      %v1317 = vsel %vm557, %v1314, %v1316
      %v1322 = vadd.f32 %v1210, %v1313
      %v1323 = vadd.f32 %v1211, %v1315
      %v1324 = vadd.f32 %v1212, %v1317
      %v1325 = vadd.f32 %v1213, %v1316
      %v1326 = vmul.f32 %v1322, 0.161373
      %v1327 = vmul.f32 %v1323, 0.161373
      %v1328 = vmul.f32 %v1324, 0.161373
      %v1329 = vmul.f32 %v1325, 0.161373
      %v1334 = vrot.slane %v1326, 4
      %v1335 = vrot.slane %v1327, 4
      %v1336 = vsel %vm595, %v1334, %v1335
      %v1337 = vrot.slane %v1328, 4
      %v1338 = vsel %vm595, %v1335, %v1337
      %v1339 = vrot.slane %v1329, 4
      %v1340 = vsel %vm595, %v1337, %v1339
      %v1344 = vadd.f32 %v1307, %v1336
      %v1345 = vadd.f32 %v1308, %v1338
      %v1346 = vadd.f32 %v1309, %v1340
      %v1347 = vrot.slane %v1210, 1
      %v1348 = vsel %vm476, %v1347, %v1220
      %v1350 = vadd.f32 %v1210, %v1348
      %v1351 = vadd.f32 %v1211, %v1222
      %v1352 = vadd.f32 %v1212, %v1224
      %v1353 = vadd.f32 %v1213, %v1223
      %v1354 = vmul.f32 %v1350, 0.25168112
      %v1355 = vmul.f32 %v1351, 0.25168112
      %v1356 = vmul.f32 %v1352, 0.25168112
      %v1357 = vmul.f32 %v1353, 0.25168112
      %v1362 = vrot.slane %v1354, 5
      %v1363 = vrot.slane %v1355, 5
      %v1364 = vsel %vm535, %v1362, %v1363
      %v1365 = vrot.slane %v1356, 5
      %v1366 = vsel %vm535, %v1363, %v1365
      %v1367 = vrot.slane %v1357, 5
      %v1368 = vsel %vm535, %v1365, %v1367
      %v1372 = vadd.f32 %v1344, %v1364
      %v1373 = vadd.f32 %v1345, %v1366
      %v1374 = vadd.f32 %v1346, %v1368
      %v1375 = vmul.f32 %v254, 0.0003202979
      %v1376 = vmul.f32 %v255, 0.0003202979
      %v1377 = vmul.f32 %v256, 0.0003202979
      %v1378 = vmul.f32 %v257, 0.0003202979
      %1383 = vrot.lane.b32.xlu0 %v254, 119
      %v1384 = vpop.permute.xlu0 %1383
      %1385 = vrot.lane.b32.xlu0 %v255, 119
      %v1386 = vpop.permute.xlu0 %1385
      %1387 = vrot.lane.b32.xlu0 %v256, 119
      %v1388 = vpop.permute.xlu0 %1387
      %1389 = vrot.lane.b32.xlu0 %v257, 119
      %v1390 = vpop.permute.xlu0 %1389
      %v1395 = vadd.f32 %v254, %v1384
      %v1396 = vadd.f32 %v255, %v1386
      %v1397 = vadd.f32 %v256, %v1388
      %v1398 = vadd.f32 %v257, %v1390
      %v1399 = vmul.f32 %v1395, 0.0029556495
      %v1400 = vmul.f32 %v1396, 0.0029556495
      %v1401 = vmul.f32 %v1397, 0.0029556495
      %v1402 = vmul.f32 %v1398, 0.0029556495
      %1407 = vrot.lane.b32.xlu0 %v1399, 127
      %v1408 = vpop.permute.xlu0 %1407
      %1409 = vrot.lane.b32.xlu0 %v1400, 127
      %v1410 = vpop.permute.xlu0 %1409
      %1411 = vrot.lane.b32.xlu0 %v1401, 127
      %v1412 = vpop.permute.xlu0 %1411
      %1413 = vrot.lane.b32.xlu0 %v1402, 127
      %v1414 = vpop.permute.xlu0 %1413
      %v1419 = vadd.f32 %v1375, %v1408
      %v1420 = vadd.f32 %v1376, %v1410
      %v1421 = vadd.f32 %v1377, %v1412
      %v1422 = vadd.f32 %v1378, %v1414
      %1423 = vrot.lane.b32.xlu0 %v254, 121
      %v1424 = vpop.permute.xlu0 %1423
      %1425 = vrot.lane.b32.xlu0 %v255, 121
      %v1426 = vpop.permute.xlu0 %1425
      %1427 = vrot.lane.b32.xlu0 %v256, 121
      %v1428 = vpop.permute.xlu0 %1427
      %1429 = vrot.lane.b32.xlu0 %v257, 121
      %v1430 = vpop.permute.xlu0 %1429
      %v1435 = vadd.f32 %v254, %v1424
      %v1436 = vadd.f32 %v255, %v1426
      %v1437 = vadd.f32 %v256, %v1428
      %v1438 = vadd.f32 %v257, %v1430
      %v1439 = vmul.f32 %v1435, 0.017487673
      %v1440 = vmul.f32 %v1436, 0.017487673
      %v1441 = vmul.f32 %v1437, 0.017487673
      %v1442 = vmul.f32 %v1438, 0.017487673
      %1447 = vrot.lane.b32.xlu0 %v1439, 126
      %v1448 = vpop.permute.xlu0 %1447
      %1449 = vrot.lane.b32.xlu0 %v1440, 126
      %v1450 = vpop.permute.xlu0 %1449
      %1451 = vrot.lane.b32.xlu0 %v1441, 126
      %v1452 = vpop.permute.xlu0 %1451
      %1453 = vrot.lane.b32.xlu0 %v1442, 126
      %v1454 = vpop.permute.xlu0 %1453
      %v1459 = vadd.f32 %v1419, %v1448
      %v1460 = vadd.f32 %v1420, %v1450
      %v1461 = vadd.f32 %v1421, %v1452
      %v1462 = vadd.f32 %v1422, %v1454
      %1463 = vrot.lane.b32.xlu0 %v254, 123
      %v1464 = vpop.permute.xlu0 %1463
      %1465 = vrot.lane.b32.xlu0 %v255, 123
      %v1466 = vpop.permute.xlu0 %1465
      %1467 = vrot.lane.b32.xlu0 %v256, 123
      %v1468 = vpop.permute.xlu0 %1467
      %1469 = vrot.lane.b32.xlu0 %v257, 123
      %v1470 = vpop.permute.xlu0 %1469
      %v1475 = vadd.f32 %v254, %v1464
      %v1476 = vadd.f32 %v255, %v1466
      %v1477 = vadd.f32 %v256, %v1468
      %v1478 = vadd.f32 %v257, %v1470
      %v1479 = vmul.f32 %v1475, 0.06634242
      %v1480 = vmul.f32 %v1476, 0.06634242
      %v1481 = vmul.f32 %v1477, 0.06634242
      %v1482 = vmul.f32 %v1478, 0.06634242
      %1487 = vrot.lane.b32.xlu0 %v1479, 125
      %v1488 = vpop.permute.xlu0 %1487
      %1489 = vrot.lane.b32.xlu0 %v1480, 125
      %v1490 = vpop.permute.xlu0 %1489
      %1491 = vrot.lane.b32.xlu0 %v1481, 125
      %v1492 = vpop.permute.xlu0 %1491
      %1493 = vrot.lane.b32.xlu0 %v1482, 125
      %v1494 = vpop.permute.xlu0 %1493
      %v1499 = vadd.f32 %v1459, %v1488
      %v1500 = vadd.f32 %v1460, %v1490
      %v1501 = vadd.f32 %v1461, %v1492
      %v1502 = vadd.f32 %v1462, %v1494
      %1503 = vrot.lane.b32.xlu0 %v254, 125
      %v1504 = vpop.permute.xlu0 %1503
      %1505 = vrot.lane.b32.xlu0 %v255, 125
      %v1506 = vpop.permute.xlu0 %1505
      %1507 = vrot.lane.b32.xlu0 %v256, 125
      %v1508 = vpop.permute.xlu0 %1507
      %1509 = vrot.lane.b32.xlu0 %v257, 125
      %v1510 = vpop.permute.xlu0 %1509
      %v1515 = vadd.f32 %v254, %v1504
      %v1516 = vadd.f32 %v255, %v1506
      %v1517 = vadd.f32 %v256, %v1508
      %v1518 = vadd.f32 %v257, %v1510
      %v1519 = vmul.f32 %v1515, 0.161373
      %v1520 = vmul.f32 %v1516, 0.161373
      %v1521 = vmul.f32 %v1517, 0.161373
      %v1522 = vmul.f32 %v1518, 0.161373
      %1527 = vrot.lane.b32.xlu0 %v1519, 124
      %v1528 = vpop.permute.xlu0 %1527
      %1529 = vrot.lane.b32.xlu0 %v1520, 124
      %v1530 = vpop.permute.xlu0 %1529
      %1531 = vrot.lane.b32.xlu0 %v1521, 124
      %v1532 = vpop.permute.xlu0 %1531
      %1533 = vrot.lane.b32.xlu0 %v1522, 124
      %v1534 = vpop.permute.xlu0 %1533
      %v1539 = vadd.f32 %v1499, %v1528
      %v1540 = vadd.f32 %v1500, %v1530
      %v1541 = vadd.f32 %v1501, %v1532
      %v1542 = vadd.f32 %v1502, %v1534
      %1543 = vrot.lane.b32.xlu0 %v254, 127
      %v1544 = vpop.permute.xlu0 %1543
      %1545 = vrot.lane.b32.xlu0 %v255, 127
      %v1546 = vpop.permute.xlu0 %1545
      %1547 = vrot.lane.b32.xlu0 %v256, 127
      %v1548 = vpop.permute.xlu0 %1547
      %1549 = vrot.lane.b32.xlu0 %v257, 127
      %v1550 = vpop.permute.xlu0 %1549
      %v1555 = vadd.f32 %v254, %v1544
      %v1556 = vadd.f32 %v255, %v1546
      %v1557 = vadd.f32 %v256, %v1548
      %v1558 = vadd.f32 %v257, %v1550
      %v1559 = vmul.f32 %v1555, 0.25168112
      %v1560 = vmul.f32 %v1556, 0.25168112
      %v1561 = vmul.f32 %v1557, 0.25168112
      %v1562 = vmul.f32 %v1558, 0.25168112
      %1567 = vrot.lane.b32.xlu0 %v1559, 123
      %v1568 = vpop.permute.xlu0 %1567
      %1569 = vrot.lane.b32.xlu0 %v1560, 123
      %v1570 = vpop.permute.xlu0 %1569
      %1571 = vrot.lane.b32.xlu0 %v1561, 123
      %v1572 = vpop.permute.xlu0 %1571
      %1573 = vrot.lane.b32.xlu0 %v1562, 123
      %v1574 = vpop.permute.xlu0 %1573
      %v1579 = vadd.f32 %v1539, %v1568
      %v1580 = vadd.f32 %v1540, %v1570
      %v1581 = vadd.f32 %v1541, %v1572
      %v1582 = vadd.f32 %v1542, %v1574
      %v1583 = vmul.f32 %v1579, 0.0003202979
      %v1584 = vmul.f32 %v1580, 0.0003202979
      %v1585 = vmul.f32 %v1581, 0.0003202979
      %v1589 = vrot.slane %v1580, 1
      %v1590 = vrot.slane %v1581, 1
      %v1591 = vsel %vm476, %v1589, %v1590
      %v1592 = vrot.slane %v1582, 1
      %v1593 = vsel %vm476, %v1590, %v1592
      %v1597 = vadd.f32 %v1579, %v1591
      %v1598 = vadd.f32 %v1580, %v1593
      %v1599 = vadd.f32 %v1581, %v1592
      %v1600 = vmul.f32 %v1597, 0.0029556495
      %v1601 = vmul.f32 %v1598, 0.0029556495
      %v1602 = vmul.f32 %v1599, 0.0029556495
      %v1606 = vrot.slane %v1600, 1
      %v1607 = vrot.slane %v1601, 1
      %v1608 = vsel %vm476, %v1606, %v1607
      %v1609 = vrot.slane %v1602, 1
      %v1610 = vsel %vm476, %v1607, %v1609
      %v1614 = vadd.f32 %v1583, %v1608
      %v1615 = vadd.f32 %v1584, %v1610
      %v1616 = vadd.f32 %v1585, %v1609
      %v1617 = vrot.slane %v1580, 7
      %v1618 = vrot.slane %v1581, 7
      %v1619 = vsel %vm505, %v1617, %v1618
      %v1620 = vrot.slane %v1582, 7
      %v1621 = vsel %vm505, %v1618, %v1620
      %v1625 = vadd.f32 %v1579, %v1617
      %v1626 = vadd.f32 %v1580, %v1619
      %v1627 = vadd.f32 %v1581, %v1621
      %v1628 = vmul.f32 %v1625, 0.017487673
      %v1629 = vmul.f32 %v1626, 0.017487673
      %v1630 = vmul.f32 %v1627, 0.017487673
      %v1634 = vrot.slane %v1628, 2
      %v1635 = vrot.slane %v1629, 2
      %v1636 = vsel %vm523, %v1634, %v1635
      %v1637 = vrot.slane %v1630, 2
      %v1638 = vsel %vm523, %v1635, %v1637
      %v1642 = vadd.f32 %v1614, %v1636
      %v1643 = vadd.f32 %v1615, %v1638
      %v1644 = vadd.f32 %v1616, %v1637
      %v1645 = vrot.slane %v1580, 5
      %v1646 = vrot.slane %v1581, 5
      %v1647 = vsel %vm535, %v1645, %v1646
      %v1648 = vrot.slane %v1582, 5
      %v1649 = vsel %vm535, %v1646, %v1648
      %v1654 = vadd.f32 %v1579, %v1645
      %v1655 = vadd.f32 %v1580, %v1647
      %v1656 = vadd.f32 %v1581, %v1649
      %v1657 = vadd.f32 %v1582, %v1648
      %v1658 = vmul.f32 %v1654, 0.06634242
      %v1659 = vmul.f32 %v1655, 0.06634242
      %v1660 = vmul.f32 %v1656, 0.06634242
      %v1661 = vmul.f32 %v1657, 0.06634242
      %v1666 = vrot.slane %v1658, 3
      %v1667 = vrot.slane %v1659, 3
      %v1668 = vsel %vm557, %v1666, %v1667
      %v1669 = vrot.slane %v1660, 3
      %v1670 = vsel %vm557, %v1667, %v1669
      %v1671 = vrot.slane %v1661, 3
      %v1672 = vsel %vm557, %v1669, %v1671
      %v1676 = vadd.f32 %v1642, %v1668
      %v1677 = vadd.f32 %v1643, %v1670
      %v1678 = vadd.f32 %v1644, %v1672
      %v1680 = vrot.slane %v1579, 3
      %v1681 = vrot.slane %v1580, 3
      %v1682 = vsel %vm557, %v1680, %v1681
      %v1683 = vrot.slane %v1581, 3
      %v1684 = vsel %vm557, %v1681, %v1683
      %v1685 = vrot.slane %v1582, 3
      %v1686 = vsel %vm557, %v1683, %v1685
      %v1691 = vadd.f32 %v1579, %v1682
      %v1692 = vadd.f32 %v1580, %v1684
      %v1693 = vadd.f32 %v1581, %v1686
      %v1694 = vadd.f32 %v1582, %v1685
      %v1695 = vmul.f32 %v1691, 0.161373
      %v1696 = vmul.f32 %v1692, 0.161373
      %v1697 = vmul.f32 %v1693, 0.161373
      %v1698 = vmul.f32 %v1694, 0.161373
      %v1703 = vrot.slane %v1695, 4
      %v1704 = vrot.slane %v1696, 4
      %v1705 = vsel %vm595, %v1703, %v1704
      %v1706 = vrot.slane %v1697, 4
      %v1707 = vsel %vm595, %v1704, %v1706
      %v1708 = vrot.slane %v1698, 4
      %v1709 = vsel %vm595, %v1706, %v1708
      %v1713 = vadd.f32 %v1676, %v1705
      %v1714 = vadd.f32 %v1677, %v1707
      %v1715 = vadd.f32 %v1678, %v1709
      %v1716 = vrot.slane %v1579, 1
      %v1717 = vsel %vm476, %v1716, %v1589
      %v1719 = vadd.f32 %v1579, %v1717
      %v1720 = vadd.f32 %v1580, %v1591
      %v1721 = vadd.f32 %v1581, %v1593
      %v1722 = vadd.f32 %v1582, %v1592
      %v1723 = vmul.f32 %v1719, 0.25168112
      %v1724 = vmul.f32 %v1720, 0.25168112
      %v1725 = vmul.f32 %v1721, 0.25168112
      %v1726 = vmul.f32 %v1722, 0.25168112
      %v1731 = vrot.slane %v1723, 5
      %v1732 = vrot.slane %v1724, 5
      %v1733 = vsel %vm535, %v1731, %v1732
      %v1734 = vrot.slane %v1725, 5
      %v1735 = vsel %vm535, %v1732, %v1734
      %v1736 = vrot.slane %v1726, 5
      %v1737 = vsel %vm535, %v1734, %v1736
      %v1741 = vadd.f32 %v1713, %v1733
      %v1742 = vadd.f32 %v1714, %v1735
      %v1743 = vadd.f32 %v1715, %v1737
      %v1744 = vmul.f32 %v258, 0.0003202979
      %v1745 = vmul.f32 %v259, 0.0003202979
      %v1746 = vmul.f32 %v260, 0.0003202979
      %v1747 = vmul.f32 %v261, 0.0003202979
      %1752 = vrot.lane.b32.xlu0 %v258, 119
      %v1753 = vpop.permute.xlu0 %1752
      %1754 = vrot.lane.b32.xlu0 %v259, 119
      %v1755 = vpop.permute.xlu0 %1754
      %1756 = vrot.lane.b32.xlu0 %v260, 119
      %v1757 = vpop.permute.xlu0 %1756
      %1758 = vrot.lane.b32.xlu0 %v261, 119
      %v1759 = vpop.permute.xlu0 %1758
      %v1764 = vadd.f32 %v258, %v1753
      %v1765 = vadd.f32 %v259, %v1755
      %v1766 = vadd.f32 %v260, %v1757
      %v1767 = vadd.f32 %v261, %v1759
      %v1768 = vmul.f32 %v1764, 0.0029556495
      %v1769 = vmul.f32 %v1765, 0.0029556495
      %v1770 = vmul.f32 %v1766, 0.0029556495
      %v1771 = vmul.f32 %v1767, 0.0029556495
      %1776 = vrot.lane.b32.xlu0 %v1768, 127
      %v1777 = vpop.permute.xlu0 %1776
      %1778 = vrot.lane.b32.xlu0 %v1769, 127
      %v1779 = vpop.permute.xlu0 %1778
      %1780 = vrot.lane.b32.xlu0 %v1770, 127
      %v1781 = vpop.permute.xlu0 %1780
      %1782 = vrot.lane.b32.xlu0 %v1771, 127
      %v1783 = vpop.permute.xlu0 %1782
      %v1788 = vadd.f32 %v1744, %v1777
      %v1789 = vadd.f32 %v1745, %v1779
      %v1790 = vadd.f32 %v1746, %v1781
      %v1791 = vadd.f32 %v1747, %v1783
      %1792 = vrot.lane.b32.xlu0 %v258, 121
      %v1793 = vpop.permute.xlu0 %1792
      %1794 = vrot.lane.b32.xlu0 %v259, 121
      %v1795 = vpop.permute.xlu0 %1794
      %1796 = vrot.lane.b32.xlu0 %v260, 121
      %v1797 = vpop.permute.xlu0 %1796
      %1798 = vrot.lane.b32.xlu0 %v261, 121
      %v1799 = vpop.permute.xlu0 %1798
      %v1804 = vadd.f32 %v258, %v1793
      %v1805 = vadd.f32 %v259, %v1795
      %v1806 = vadd.f32 %v260, %v1797
      %v1807 = vadd.f32 %v261, %v1799
      %v1808 = vmul.f32 %v1804, 0.017487673
      %v1809 = vmul.f32 %v1805, 0.017487673
      %v1810 = vmul.f32 %v1806, 0.017487673
      %v1811 = vmul.f32 %v1807, 0.017487673
      %1816 = vrot.lane.b32.xlu0 %v1808, 126
      %v1817 = vpop.permute.xlu0 %1816
      %1818 = vrot.lane.b32.xlu0 %v1809, 126
      %v1819 = vpop.permute.xlu0 %1818
      %1820 = vrot.lane.b32.xlu0 %v1810, 126
      %v1821 = vpop.permute.xlu0 %1820
      %1822 = vrot.lane.b32.xlu0 %v1811, 126
      %v1823 = vpop.permute.xlu0 %1822
      %v1828 = vadd.f32 %v1788, %v1817
      %v1829 = vadd.f32 %v1789, %v1819
      %v1830 = vadd.f32 %v1790, %v1821
      %v1831 = vadd.f32 %v1791, %v1823
      %1832 = vrot.lane.b32.xlu0 %v258, 123
      %v1833 = vpop.permute.xlu0 %1832
      %1834 = vrot.lane.b32.xlu0 %v259, 123
      %v1835 = vpop.permute.xlu0 %1834
      %1836 = vrot.lane.b32.xlu0 %v260, 123
      %v1837 = vpop.permute.xlu0 %1836
      %1838 = vrot.lane.b32.xlu0 %v261, 123
      %v1839 = vpop.permute.xlu0 %1838
      %v1844 = vadd.f32 %v258, %v1833
      %v1845 = vadd.f32 %v259, %v1835
      %v1846 = vadd.f32 %v260, %v1837
      %v1847 = vadd.f32 %v261, %v1839
      %v1848 = vmul.f32 %v1844, 0.06634242
      %v1849 = vmul.f32 %v1845, 0.06634242
      %v1850 = vmul.f32 %v1846, 0.06634242
      %v1851 = vmul.f32 %v1847, 0.06634242
      %1856 = vrot.lane.b32.xlu0 %v1848, 125
      %v1857 = vpop.permute.xlu0 %1856
      %1858 = vrot.lane.b32.xlu0 %v1849, 125
      %v1859 = vpop.permute.xlu0 %1858
      %1860 = vrot.lane.b32.xlu0 %v1850, 125
      %v1861 = vpop.permute.xlu0 %1860
      %1862 = vrot.lane.b32.xlu0 %v1851, 125
      %v1863 = vpop.permute.xlu0 %1862
      %v1868 = vadd.f32 %v1828, %v1857
      %v1869 = vadd.f32 %v1829, %v1859
      %v1870 = vadd.f32 %v1830, %v1861
      %v1871 = vadd.f32 %v1831, %v1863
      %1872 = vrot.lane.b32.xlu0 %v258, 125
      %v1873 = vpop.permute.xlu0 %1872
      %1874 = vrot.lane.b32.xlu0 %v259, 125
      %v1875 = vpop.permute.xlu0 %1874
      %1876 = vrot.lane.b32.xlu0 %v260, 125
      %v1877 = vpop.permute.xlu0 %1876
      %1878 = vrot.lane.b32.xlu0 %v261, 125
      %v1879 = vpop.permute.xlu0 %1878
      %v1884 = vadd.f32 %v258, %v1873
      %v1885 = vadd.f32 %v259, %v1875
      %v1886 = vadd.f32 %v260, %v1877
      %v1887 = vadd.f32 %v261, %v1879
      %v1888 = vmul.f32 %v1884, 0.161373
      %v1889 = vmul.f32 %v1885, 0.161373
      %v1890 = vmul.f32 %v1886, 0.161373
      %v1891 = vmul.f32 %v1887, 0.161373
      %1896 = vrot.lane.b32.xlu0 %v1888, 124
      %v1897 = vpop.permute.xlu0 %1896
      %1898 = vrot.lane.b32.xlu0 %v1889, 124
      %v1899 = vpop.permute.xlu0 %1898
      %1900 = vrot.lane.b32.xlu0 %v1890, 124
      %v1901 = vpop.permute.xlu0 %1900
      %1902 = vrot.lane.b32.xlu0 %v1891, 124
      %v1903 = vpop.permute.xlu0 %1902
      %v1908 = vadd.f32 %v1868, %v1897
      %v1909 = vadd.f32 %v1869, %v1899
      %v1910 = vadd.f32 %v1870, %v1901
      %v1911 = vadd.f32 %v1871, %v1903
      %1912 = vrot.lane.b32.xlu0 %v258, 127
      %v1913 = vpop.permute.xlu0 %1912
      %1914 = vrot.lane.b32.xlu0 %v259, 127
      %v1915 = vpop.permute.xlu0 %1914
      %1916 = vrot.lane.b32.xlu0 %v260, 127
      %v1917 = vpop.permute.xlu0 %1916
      %1918 = vrot.lane.b32.xlu0 %v261, 127
      %v1919 = vpop.permute.xlu0 %1918
      %v1924 = vadd.f32 %v258, %v1913
      %v1925 = vadd.f32 %v259, %v1915
      %v1926 = vadd.f32 %v260, %v1917
      %v1927 = vadd.f32 %v261, %v1919
      %v1928 = vmul.f32 %v1924, 0.25168112
      %v1929 = vmul.f32 %v1925, 0.25168112
      %v1930 = vmul.f32 %v1926, 0.25168112
      %v1931 = vmul.f32 %v1927, 0.25168112
      %1936 = vrot.lane.b32.xlu0 %v1928, 123
      %v1937 = vpop.permute.xlu0 %1936
      %1938 = vrot.lane.b32.xlu0 %v1929, 123
      %v1939 = vpop.permute.xlu0 %1938
      %1940 = vrot.lane.b32.xlu0 %v1930, 123
      %v1941 = vpop.permute.xlu0 %1940
      %1942 = vrot.lane.b32.xlu0 %v1931, 123
      %v1943 = vpop.permute.xlu0 %1942
      %v1948 = vadd.f32 %v1908, %v1937
      %v1949 = vadd.f32 %v1909, %v1939
      %v1950 = vadd.f32 %v1910, %v1941
      %v1951 = vadd.f32 %v1911, %v1943
      %v1952 = vmul.f32 %v1948, 0.0003202979
      %v1953 = vmul.f32 %v1949, 0.0003202979
      %v1954 = vmul.f32 %v1950, 0.0003202979
      %v1958 = vrot.slane %v1949, 1
      %v1959 = vrot.slane %v1950, 1
      %v1960 = vsel %vm476, %v1958, %v1959
      %v1961 = vrot.slane %v1951, 1
      %v1962 = vsel %vm476, %v1959, %v1961
      %v1966 = vadd.f32 %v1948, %v1960
      %v1967 = vadd.f32 %v1949, %v1962
      %v1968 = vadd.f32 %v1950, %v1961
      %v1969 = vmul.f32 %v1966, 0.0029556495
      %v1970 = vmul.f32 %v1967, 0.0029556495
      %v1971 = vmul.f32 %v1968, 0.0029556495
      %v1975 = vrot.slane %v1969, 1
      %v1976 = vrot.slane %v1970, 1
      %v1977 = vsel %vm476, %v1975, %v1976
      %v1978 = vrot.slane %v1971, 1
      %v1979 = vsel %vm476, %v1976, %v1978
      %v1983 = vadd.f32 %v1952, %v1977
      %v1984 = vadd.f32 %v1953, %v1979
      %v1985 = vadd.f32 %v1954, %v1978
      %v1986 = vrot.slane %v1949, 7
      %v1987 = vrot.slane %v1950, 7
      %v1988 = vsel %vm505, %v1986, %v1987
      %v1989 = vrot.slane %v1951, 7
      %v1990 = vsel %vm505, %v1987, %v1989
      %v1994 = vadd.f32 %v1948, %v1986
      %v1995 = vadd.f32 %v1949, %v1988
      %v1996 = vadd.f32 %v1950, %v1990
      %v1997 = vmul.f32 %v1994, 0.017487673
      %v1998 = vmul.f32 %v1995, 0.017487673
      %v1999 = vmul.f32 %v1996, 0.017487673
      %v2003 = vrot.slane %v1997, 2
      %v2004 = vrot.slane %v1998, 2
      %v2005 = vsel %vm523, %v2003, %v2004
      %v2006 = vrot.slane %v1999, 2
      %v2007 = vsel %vm523, %v2004, %v2006
      %v2011 = vadd.f32 %v1983, %v2005
      %v2012 = vadd.f32 %v1984, %v2007
      %v2013 = vadd.f32 %v1985, %v2006
      %v2014 = vrot.slane %v1949, 5
      %v2015 = vrot.slane %v1950, 5
      %v2016 = vsel %vm535, %v2014, %v2015
      %v2017 = vrot.slane %v1951, 5
      %v2018 = vsel %vm535, %v2015, %v2017
      %v2023 = vadd.f32 %v1948, %v2014
      %v2024 = vadd.f32 %v1949, %v2016
      %v2025 = vadd.f32 %v1950, %v2018
      %v2026 = vadd.f32 %v1951, %v2017
      %v2027 = vmul.f32 %v2023, 0.06634242
      %v2028 = vmul.f32 %v2024, 0.06634242
      %v2029 = vmul.f32 %v2025, 0.06634242
      %v2030 = vmul.f32 %v2026, 0.06634242
      %v2035 = vrot.slane %v2027, 3
      %v2036 = vrot.slane %v2028, 3
      %v2037 = vsel %vm557, %v2035, %v2036
      %v2038 = vrot.slane %v2029, 3
      %v2039 = vsel %vm557, %v2036, %v2038
      %v2040 = vrot.slane %v2030, 3
      %v2041 = vsel %vm557, %v2038, %v2040
      %v2045 = vadd.f32 %v2011, %v2037
      %v2046 = vadd.f32 %v2012, %v2039
      %v2047 = vadd.f32 %v2013, %v2041
      %v2049 = vrot.slane %v1948, 3
      %v2050 = vrot.slane %v1949, 3
      %v2051 = vsel %vm557, %v2049, %v2050
      %v2052 = vrot.slane %v1950, 3
      %v2053 = vsel %vm557, %v2050, %v2052
      %v2054 = vrot.slane %v1951, 3
      %v2055 = vsel %vm557, %v2052, %v2054
      %v2060 = vadd.f32 %v1948, %v2051
      %v2061 = vadd.f32 %v1949, %v2053
      %v2062 = vadd.f32 %v1950, %v2055
      %v2063 = vadd.f32 %v1951, %v2054
      %v2064 = vmul.f32 %v2060, 0.161373
      %v2065 = vmul.f32 %v2061, 0.161373
      %v2066 = vmul.f32 %v2062, 0.161373
      %v2067 = vmul.f32 %v2063, 0.161373
      %v2072 = vrot.slane %v2064, 4
      %v2073 = vrot.slane %v2065, 4
      %v2074 = vsel %vm595, %v2072, %v2073
      %v2075 = vrot.slane %v2066, 4
      %v2076 = vsel %vm595, %v2073, %v2075
      %v2077 = vrot.slane %v2067, 4
      %v2078 = vsel %vm595, %v2075, %v2077
      %v2082 = vadd.f32 %v2045, %v2074
      %v2083 = vadd.f32 %v2046, %v2076
      %v2084 = vadd.f32 %v2047, %v2078
      %v2085 = vrot.slane %v1948, 1
      %v2086 = vsel %vm476, %v2085, %v1958
      %v2088 = vadd.f32 %v1948, %v2086
      %v2089 = vadd.f32 %v1949, %v1960
      %v2090 = vadd.f32 %v1950, %v1962
      %v2091 = vadd.f32 %v1951, %v1961
      %v2092 = vmul.f32 %v2088, 0.25168112
      %v2093 = vmul.f32 %v2089, 0.25168112
      %v2094 = vmul.f32 %v2090, 0.25168112
      %v2095 = vmul.f32 %v2091, 0.25168112
      %v2100 = vrot.slane %v2092, 5
      %v2101 = vrot.slane %v2093, 5
      %v2102 = vsel %vm535, %v2100, %v2101
      %v2103 = vrot.slane %v2094, 5
      %v2104 = vsel %vm535, %v2101, %v2103
      %v2105 = vrot.slane %v2095, 5
      %v2106 = vsel %vm535, %v2103, %v2105
      %v2110 = vadd.f32 %v2082, %v2102
      %v2111 = vadd.f32 %v2083, %v2104
      %v2112 = vadd.f32 %v2084, %v2106
      %v2113 = vmul.f32 %v634, %v634
      %v2114 = vmul.f32 %v635, %v635
      %v2115 = vmul.f32 %v636, %v636
      %v2116 = vmul.f32 %v1003, %v1003
      %v2117 = vmul.f32 %v1004, %v1004
      %v2118 = vmul.f32 %v1005, %v1005
      %v2119 = vmul.f32 %v634, %v1003
      %v2120 = vmul.f32 %v635, %v1004
      %v2121 = vmul.f32 %v636, %v1005
      %v2122 = vsub.f32 %v1372, %v2113
      %v2123 = vsub.f32 %v1373, %v2114
      %v2124 = vsub.f32 %v1374, %v2115
      %v2125 = vsub.f32 %v1741, %v2116
      %v2126 = vsub.f32 %v1742, %v2117
      %v2127 = vsub.f32 %v1743, %v2118
      %v2128 = vsub.f32 %v2110, %v2119
      %v2129 = vsub.f32 %v2111, %v2120
      %v2130 = vsub.f32 %v2112, %v2121
      %v2131 = vmul.f32 %v2119, 2.0
      %v2132 = vmul.f32 %v2120, 2.0
      %v2133 = vmul.f32 %v2121, 2.0
      %v2134 = vadd.f32 %v2131, 0.0001
      %v2135 = vadd.f32 %v2132, 0.0001
      %v2136 = vadd.f32 %v2133, 0.0001
      %v2137 = vmul.f32 %v2128, 2.0
      %v2138 = vmul.f32 %v2129, 2.0
      %v2139 = vmul.f32 %v2130, 2.0
      %v2140 = vadd.f32 %v2137, 0.0009
      %v2141 = vadd.f32 %v2138, 0.0009
      %v2142 = vadd.f32 %v2139, 0.0009
      %v2143 = vmul.f32 %v2134, %v2140
      %v2144 = vmul.f32 %v2135, %v2141
      %v2145 = vmul.f32 %v2136, %v2142
      %v2146 = vadd.f32 %v2113, %v2116
      %v2147 = vadd.f32 %v2114, %v2117
      %v2148 = vadd.f32 %v2115, %v2118
      %v2149 = vadd.f32 %v2146, 0.0001
      %v2150 = vadd.f32 %v2147, 0.0001
      %v2151 = vadd.f32 %v2148, 0.0001
      %v2152 = vadd.f32 %v2122, %v2125
      %v2153 = vadd.f32 %v2123, %v2126
      %v2154 = vadd.f32 %v2124, %v2127
      %v2155 = vadd.f32 %v2152, 0.0009
      %v2156 = vadd.f32 %v2153, 0.0009
      %v2157 = vadd.f32 %v2154, 0.0009
      %v2158 = vmul.f32 %v2149, %v2155
      %v2159 = vmul.f32 %v2150, %v2156
      %v2160 = vmul.f32 %v2151, %v2157
      %v2161 = vrcp.pop %v2158
      %v2162 = vrcp.pop %v2159
      %v2163 = vrcp.pop %v2160
      %v2164 = vmul.f32 %v2143, %v2161
      %v2165 = vmul.f32 %v2144, %v2162
      %v2166 = vmul.f32 %v2145, %v2163
      %v2167 = vld [vmem:[%s236] sm:$0xff]
      %v2168 = vld [vmem:[%s236 + $0x8] sm:$0xff]
      %v2169 = vld [vmem:[%s236 + $0x10] sm:$0xff]
      %v2170 = vld [vmem:[%s3] sm:$0x1]
      %2172 = vset.pattern.permute.xlu0 0
      %2173 = vperm.xlu0 %2172, %v2167
      %v2174 = vpop.permute.xlu0 %2173
      %2177 = vset.pattern.permute.xlu0 0
      %2178 = vperm.xlu0 %2177, %v2168
      %v2179 = vpop.permute.xlu0 %2178
      %2182 = vset.pattern.permute.xlu0 0
      %2183 = vperm.xlu0 %2182, %v2169
      %v2184 = vpop.permute.xlu0 %2183
      %v2186 = vmul.f32 %v2164, %v2174
      %v2187 = vmul.f32 %v2165, %v2179
      %v2188 = vmul.f32 %v2166, %v2184
      %v2190 = vperm.slane %v2170, 0
      %v2192 = vmul.f32 %v2186, %v2190
      %v2193 = vmul.f32 %v2187, %v2190
      %v2194 = vmul.f32 %v2188, %v2190
      %vm2195 = vcmask 965632
      %v2196 = vsel %vm2195, %v2192, 0.0
      %v2197 = vsel %vm2195, %v2193, 0.0
      %v2198 = vadd.f32 %v2196, %v2197
      %vm2199 = vcmask 963584
      %v2200 = vsel %vm2199, %v2194, 0.0
      %v2201 = vadd.f32 %v2198, %v2200
      %2202 = vadd.xlane.f32.xlu0 %v2201
      %v2203 = vpop.xlane.xlu0 %2202
      %v2204 = vrot.slane %v2203, 4
      %v2205 = vadd.f32 %v2203, %v2204
      %v2206 = vrot.slane %v2205, 2
      %v2207 = vadd.f32 %v2205, %v2206
      %v2208 = vrot.slane %v2207, 1
      %v2209 = vadd.f32 %v2207, %v2208
      %s2210 = vtos %v2209
      %v2211 = vstv %s2210
      %2212 = vst [vmem:[%s241] sm:$0xff] %v2211
      %p2213 = scmp.lt.s32.totalorder %s15, 1
      %s2214 = scalar_select %p2213, %s15, 1
      %s2215 = smul.addr %s2214, 8
      %s2216 = scalar_lea.vmem %s4, %s2215
      // Predicated region
      $region37: #{ssim_loss.1} parent=35 // pred_check
        %p2217 = pneg %p132
      $region38: #{ssim_loss.1} parent=35 // pred_check_branch
        %2219 = sbr.rel (%p2217) target = $region40
      $region39: #{ssim_loss.1} parent=35 // pred_region
        _
      $region40: #{ssim_loss.1} parent=35 // pred_fallthru
        _
    $region36: #{ssim_loss.1} parent=5 // pred_fallthru
      _
    %p2220 = scmp.le.s32.totalorder 2, %s10
    // Predicated region
    $region41: #{ssim_loss.1} parent=5 // pred_check
      %p2221 = pneg %p2220
    $region42: #{ssim_loss.1} parent=5 // pred_check_branch
      %2223 = sbr.rel (%p2221) target = $region44
    $region43: #{ssim_loss.1} parent=5 // pred_region
      %s2224 = ssub.s32 %s10, 2
      // Predicated region
      $region45: #{ssim_loss.1} parent=43 // pred_check
        %p2225 = pneg %p138
      $region46: #{ssim_loss.1} parent=43 // pred_check_branch
        %2227 = sbr.rel (%p2225) target = $region48
      $region47: #{ssim_loss.1} parent=43 // pred_region
        %p2228 = scmp.lt.s32.totalorder %s16, 1
        %s2229 = scalar_select %p2228, %s16, 1
        %s2230 = smul.addr %s2229, 8
        %s2231 = scalar_lea.vmem %s4, %s2230
      $region48: #{ssim_loss.1} parent=43 // pred_fallthru
        _
    $region44: #{ssim_loss.1} parent=5 // pred_fallthru
      _
  $region6: #{ssim_loss.1} parent=0 // loop_footer
    %s14 = sadd.s32 1, %s10
  $region7: #{ssim_loss.1} parent=0 // loop_footer_branch
    %9 = sbr.rel target = $region3
  $region8: #{ssim_loss.1} parent=0 // loop_exit
    _

</llo_original>
